<compile_context>
chip_gen: v7x
topology: tpu7x:2x2x1
jax: 0.10.0
libtpu: 0.0.40
codegen_flags: <defaults>
</compile_context>

<pallas_src>
import functools

import jax
import jax.numpy as jnp
from jax import lax
from jax.experimental import pallas as pl
from jax.experimental.pallas import tpu as pltpu


def autopad(k, p=None):
    if p is None:
        p = k // 2 if isinstance(k, int) else [x // 2 for x in k]
    return p


def _conv_bn_hswish_kernel(x_ref, w_ref, b_ref, o_ref, xpad_ref, slab_ref, *,
                           k, s, p, th, wo, h, ho, cin_pad, act):
    # x_ref   : (1, Cin, H, W)          unpadded f32 image, VMEM-resident across row tiles
    # w_ref   : (Cout, k*k*Cin_pad)     BN-scaled conv weights (bf16, Cin zero-padded)
    # b_ref   : (Cout, 1)               folded BN bias (f32)
    # o_ref   : (1, Cout, th*wo)        lane-dense output tile
    # xpad_ref: (Cin, th_in, Wp) bf16   scratch: zero-padded + casted row window (with halo)
    # slab_ref: (k*k*Cin_pad, th*wo)    scratch: im2col slab (bf16)
    cin = x_ref.shape[1]
    w_img = x_ref.shape[3]
    cout = w_ref.shape[0]
    th_in = (th - 1) * s + k
    n_t = ho // th

    t = pl.program_id(1)

    # ---- Stage 1: padded bf16 row window (fuses zero-padding + f32->bf16 cast) ----
    if p == 0:
        r0 = t * (th * s)
        if (th * s) % 8 == 0:
            r0 = pl.multiple_of(r0, 8)
        xpad_ref[...] = x_ref[0, :, pl.ds(r0, th_in), :].astype(jnp.bfloat16)
    else:
        xpad_ref[...] = jnp.zeros_like(xpad_ref)       # halo rows + width padding zeros
        col = slice(p, p + w_img)                       # valid columns inside padded window
        hp = h + 2 * p
        excess = hp - ((ho - 1) * s + k)                # unused bottom padded rows (< s)
        if n_t == 1:
            n_valid = min(h, th_in - p)
            xpad_ref[:, p:p + n_valid, col] = x_ref[0, :, 0:n_valid, :].astype(jnp.bfloat16)
        else:
            n_first = th_in - p
            bot_pad = max(0, p - excess)
            n_last = th_in - bot_pad
            r_last = (ho - th) * s - p

            @pl.when(t == 0)
            def _():
                xpad_ref[:, p:th_in, col] = x_ref[0, :, 0:n_first, :].astype(jnp.bfloat16)

            @pl.when(t == n_t - 1)
            def _():
                xpad_ref[:, 0:n_last, col] = (
                    x_ref[0, :, r_last:r_last + n_last, :].astype(jnp.bfloat16))

            @pl.when((t > 0) & (t < n_t - 1))
            def _():
                r0 = t * (th * s) - p
                xpad_ref[:, :, col] = x_ref[0, :, pl.ds(r0, th_in), :].astype(jnp.bfloat16)

    # ---- Stage 2: im2col slab, contraction ordered (kh, kw, ci) to match the weights.
    # Direct per-tap stores into VMEM scratch bound vreg live ranges (no concatenate).
    for kh in range(k):
        for kw in range(k):
            base = (kh * k + kw) * cin_pad
            if s == 1:
                patch = xpad_ref[:, kh:kh + th, kw:kw + wo]            # (Cin, th, wo)
            else:
                # TODO(synk): s > 1 uses lane-strided value slicing; a space-to-depth
                # rearrangement in the wrapper would avoid the lane gather entirely.
                blk = xpad_ref[:, kh:kh + (th - 1) * s + 1, kw:kw + (wo - 1) * s + 1]
                patch = blk[:, ::s, ::s]
            slab_ref[base:base + cin, :] = patch.reshape(cin, th * wo)
            if cin_pad > cin:
                slab_ref[base + cin:base + cin_pad, :] = jnp.zeros(
                    (cin_pad - cin, th * wo), jnp.bfloat16)

    # ---- Stage 3: one collapsed MXU contraction + BN bias + hardswish ----
    acc = jnp.dot(w_ref[...], slab_ref[...],
                  preferred_element_type=jnp.float32)                  # (Cout, th*wo)
    y = acc + b_ref[...]
    if act:  # Hardswish: x * relu6(x + 3) / 6
        y = y * jnp.clip(y + 3.0, 0.0, 6.0) * (1.0 / 6.0)
    o_ref[...] = y.reshape(1, cout, th * wo).astype(o_ref.dtype)


def _choose_block_h(ho, wo, w, cin, cin_pad, cout, k, s, p, out_bytes,
                    target_lanes=512, tile_budget=6 << 20):
    """Pick a row tile: lane-dense (multiple of 128, ideally >=512) within a VMEM budget."""
    wp = w + 2 * p
    cands = []
    for bh in range(1, ho + 1):
        if ho % bh:
            continue
        if (bh * wo) % 128:
            continue
        n_t = ho // bh
        if p > 0 and n_t > 1 and bh * s < p:
            continue                      # keep halo handling confined to first/last tiles
        th_in = (bh - 1) * s + k
        lanes = bh * wo
        need = (k * k * cin_pad * lanes * 2        # im2col slab (bf16)
                + cin * th_in * wp * 2             # padded row window (bf16)
                + cout * lanes * 4                 # f32 accumulator
                + 2 * cout * lanes * out_bytes)    # double-buffered output tile
        if need > tile_budget:
            continue
        cands.append((bh, lanes))
    if not cands:
        # TODO(synk): ragged / non-128-multiple tiling (masked stores) for odd Ho*Wo.
        return ho
    good = [bh for bh, lanes in cands if lanes >= target_lanes]
    if good:
        return min(good)
    return max(cands, key=lambda c: c[1])[0]


def conv_bn_hswish(x_nchw, weight_oihw, gamma, beta, running_mean, running_var,
                   *, k=1, s=1, p=None, g=1, act=True, eps=1e-5,
                   block_h=None, out_dtype=None, vmem_limit_bytes=None):
    """Pallas forward of Conv(c1, c2, k, s, p, g, act) in eval mode (NCHW in / NCHW out)."""
    assert g == 1  # TODO(synk): grouped conv (g > 1) not implemented in this kernel.
    p = autopad(k, p)

    N, Cin, H, W = x_nchw.shape
    Cout = weight_oihw.shape[0]
    Hp, Wp = H + 2 * p, W + 2 * p
    Ho = (Hp - k) // s + 1
    Wo = (Wp - k) // s + 1
    out_dtype = x_nchw.dtype if out_dtype is None else out_dtype
    out_bytes = jnp.dtype(out_dtype).itemsize

    # Pad Cin so every im2col tap occupies a sublane-aligned row block of the slab.
    Cin_pad = Cin if Cin % 8 == 0 else ((Cin + 7) // 8) * 8
    Kc = k * k * Cin_pad

    # Fold BN scale into the conv weights (exact in eval mode); only the bias stays in-kernel.
    scale = gamma / jnp.sqrt(running_var + eps)                               # (Cout,)
    w4 = jnp.transpose(weight_oihw, (0, 2, 3, 1)) * scale[:, None, None, None]
    if Cin_pad > Cin:
        w4 = jnp.pad(w4, ((0, 0), (0, 0), (0, 0), (0, Cin_pad - Cin)))
    w2d = w4.reshape(Cout, Kc).astype(jnp.bfloat16)                           # (Cout, Kc)
    bias = (beta - running_mean * scale).astype(jnp.float32).reshape(Cout, 1)

    if block_h is None:
        block_h = _choose_block_h(Ho, Wo, W, Cin, Cin_pad, Cout, k, s, p, out_bytes)
    n_t = Ho // block_h
    assert Ho % block_h == 0, (Ho, block_h)
    assert (block_h * Wo) % 128 == 0 or block_h == Ho, (block_h, Wo)
    if p > 0 and n_t > 1:
        assert block_h * s >= p, (block_h, s, p)
    th_in = (block_h - 1) * s + k

    kern = functools.partial(_conv_bn_hswish_kernel, k=k, s=s, p=p, th=block_h,
                             wo=Wo, h=H, ho=Ho, cin_pad=Cin_pad, act=act)

    # Rough VMEM budget (double-buffered blocks + scratch) with headroom.
    if vmem_limit_bytes is None:
        need = (2 * Cin * H * W * x_nchw.dtype.itemsize          # input block (x2 buffers)
                + 2 * Cout * Kc * 2                              # weights (x2 buffers)
                + 2 * Cout * block_h * Wo * out_bytes            # output tile (x2 buffers)
                + Cin * th_in * Wp * 2 + Kc * block_h * Wo * 2   # scratch
                + Cout * block_h * Wo * 4)                       # f32 accumulator
        vmem_limit_bytes = min(max(int(1.5 * need) + (8 << 20), 32 << 20), 100 << 20)
        # TODO(synk): when Cin*H*W is too large for whole-image VMEM residency (esp. v7x's
        # 64 MiB), switch x to memory_space=pl.ANY and manually double-buffer
        # (block_h*s + k - 1)-row windows with pltpu.make_async_copy.

    cost = pl.CostEstimate(
        flops=2 * N * Cout * Ho * Wo * k * k * Cin,
        transcendentals=0,
        bytes_accessed=(N * Cin * H * W * x_nchw.dtype.itemsize
                        + Cout * Kc * 2
                        + N * Cout * Ho * Wo * out_bytes),
    )

    out = pl.pallas_call(
        kern,
        out_shape=jax.ShapeDtypeStruct((N, Cout, Ho * Wo), out_dtype),
        grid=(N, n_t),
        in_specs=[
            # Unpadded image: block index constant across row tiles -> DMA'd once per image.
            pl.BlockSpec((1, Cin, H, W), lambda n, t: (n, 0, 0, 0)),
            # TODO(synk): pipeline_mode=pl.Buffered(1) on these constant-index operands to
            # reclaim the second buffer on VMEM-tight parts (v7x).
            pl.BlockSpec((Cout, Kc), lambda n, t: (0, 0)),
            pl.BlockSpec((Cout, 1), lambda n, t: (0, 0)),
        ],
        out_specs=pl.BlockSpec((1, Cout, block_h * Wo), lambda n, t: (n, 0, t)),
        scratch_shapes=[
            pltpu.VMEM((Cin, th_in, Wp), jnp.bfloat16),        # padded row window (with halo)
            pltpu.VMEM((Kc, block_h * Wo), jnp.bfloat16),      # im2col slab
        ],
        compiler_params=pltpu.CompilerParams(
            # Batch axis is the megacore-parallel axis so the per-image VMEM-resident input
            # is not duplicated into both TensorCores; row tiles run sequentially per image.
            dimension_semantics=("parallel", "arbitrary"),
            vmem_limit_bytes=vmem_limit_bytes,
        ),
        cost_estimate=cost,
    )(x_nchw, w2d, bias)

    # Flattened spatial -> (Ho, Wo); element order unchanged (cheap reshape, no transpose).
    return out.reshape(N, Cout, Ho, Wo)


def _reference(x_nchw, weight_oihw, gamma, beta, running_mean, running_var,
               *, k, s, p, act, eps=1e-5):
    p = autopad(k, p)
    y = lax.conv_general_dilated(
        x_nchw, weight_oihw, window_strides=(s, s),
        padding=[(p, p), (p, p)],
        dimension_numbers=("NCHW", "OIHW", "NCHW"))
    c = lambda v: v[None, :, None, None]
    y = (y - c(running_mean)) / jnp.sqrt(c(running_var) + eps) * c(gamma) + c(beta)
    if act:
        y = y * jnp.clip(y + 3.0, 0.0, 6.0) / 6.0
    return y


def _make_case(key, N, C1, C2, K, H, W):
    kx, kw, kg, kb, km, kv = jax.random.split(key, 6)
    x = jax.random.normal(kx, (N, C1, H, W), jnp.float32)
    weight = 0.1 * jax.random.normal(kw, (C2, C1, K, K), jnp.float32)   # Conv2d, bias=False
    gamma = 1.0 + 0.1 * jax.random.normal(kg, (C2,), jnp.float32)       # BN weight
    beta = 0.1 * jax.random.normal(kb, (C2,), jnp.float32)              # BN bias
    mean = 0.1 * jax.random.normal(km, (C2,), jnp.float32)
    var = jax.random.uniform(kv, (C2,), jnp.float32, minval=0.5, maxval=1.5)
    return x, weight, gamma, beta, mean, var


if __name__ == "__main__":
    keys = jax.random.split(jax.random.PRNGKey(0), 4)

    cases = [
        # Primary config: Conv(4, 8, k=3, s=1) on (2, 4, 16, 16); explicit row tiling
        # (block_h=8 -> 2 row tiles / image, exercises the first/last halo branches).
        dict(N=2, C1=4, C2=8, K=3, S=1, H=16, W=16, act=True, block_h=8),
        # Interior halo tiles (block_h=4 -> 8 row tiles / image).
        dict(N=2, C1=4, C2=8, K=3, S=1, H=32, W=32, act=True, block_h=4),
        # 1x1 conv (no padding path), act=False, auto block_h.
        dict(N=2, C1=4, C2=16, K=1, S=1, H=16, W=16, act=False, block_h=None),
        # Cin=3 (channel padding path), single-tile padded path, auto block_h.
        dict(N=1, C1=3, C2=8, K=3, S=1, H=16, W=16, act=True, block_h=None),
    ]

    for i, (cfg, key) in enumerate(zip(cases, keys)):
        x, weight, gamma, beta, mean, var = _make_case(
            key, cfg["N"], cfg["C1"], cfg["C2"], cfg["K"], cfg["H"], cfg["W"])
        out = conv_bn_hswish(x, weight, gamma, beta, mean, var,
                             k=cfg["K"], s=cfg["S"], p=None, g=1, act=cfg["act"],
                             block_h=cfg["block_h"])
        out = jax.block_until_ready(out)
        ref = _reference(x, weight, gamma, beta, mean, var,
                         k=cfg["K"], s=cfg["S"], p=None, act=cfg["act"])
        assert out.shape == ref.shape, (i, out.shape, ref.shape)
        err = float(jnp.max(jnp.abs(out - ref)))
        assert jnp.allclose(out, ref, atol=2e-2, rtol=2e-2), (i, err)

    print("KERNEL_OK")
</pallas_src>

<mosaic_0001>
module attributes {stable_mosaic.version = 11 : i64} {
  func.func @_conv_bn_hswish_kernel(%arg0: i32, %arg1: i32, %arg2: memref<1x4x16x16xf32, #tpu.memory_space<vmem>>, %arg3: memref<8x72xbf16, #tpu.memory_space<vmem>>, %arg4: memref<8x1xf32, #tpu.memory_space<vmem>>, %arg5: memref<1x8x128xf32, #tpu.memory_space<vmem>>, %arg6: memref<4x10x18xbf16, #tpu.memory_space<vmem>>, %arg7: memref<72x128xbf16, #tpu.memory_space<vmem>>) attributes {dimension_semantics = [#tpu.dimension_semantics<parallel>, #tpu.dimension_semantics<arbitrary>], iteration_bounds = array<i64: 2, 2>, scalar_prefetch = 0 : i64, scratch_operands = 2 : i64, tpu.core_type = #tpu.core_type<tc>, window_params = [{transform_indices = @transform_0, window_bounds = array<i64: 1, 4, 16, 16>}, {pipeline_mode = #tpu.pipeline_mode<synchronous>, transform_indices = @transform_1, window_bounds = array<i64: 8, 72>}, {pipeline_mode = #tpu.pipeline_mode<synchronous>, transform_indices = @transform_2, window_bounds = array<i64: 8, 1>}, {transform_indices = @transform_3, window_bounds = array<i64: 1, 8, 128>}]} {
    %cst = arith.constant 0.000000e+00 : bf16
    %0 = vector.broadcast %cst : bf16 to vector<4x10x18xbf16>
    %c0 = arith.constant 0 : index
    %c0_0 = arith.constant 0 : index
    %c0_1 = arith.constant 0 : index
    %1 = vector.load %arg6[%c0, %c0_0, %c0_1] : memref<4x10x18xbf16, #tpu.memory_space<vmem>>, vector<4x10x18xbf16>
    tpu.vector_store %arg6[%c0, %c0_0, %c0_1], %0 {strides = array<i32>} : memref<4x10x18xbf16, #tpu.memory_space<vmem>>, vector<4x10x18xbf16>,
    %c0_i32 = arith.constant 0 : i32
    %2 = arith.cmpi eq, %arg1, %c0_i32 : i32
    %3 = arith.extui %2 : i1 to i32
    %c0_i32_2 = arith.constant 0 : i32
    %4 = arith.cmpi ne, %3, %c0_i32_2 : i32
    scf.if %4 {
      %c0_74 = arith.constant 0 : index
      %c0_75 = arith.constant 0 : index
      %c0_76 = arith.constant 0 : index
      %c0_77 = arith.constant 0 : index
      %75 = vector.load %arg2[%c0_74, %c0_75, %c0_76, %c0_77] : memref<1x4x16x16xf32, #tpu.memory_space<vmem>>, vector<1x4x9x16xf32>
      %76 = vector.shape_cast %75 : vector<1x4x9x16xf32> to vector<4x9x16xf32>
      %77 = arith.truncf %76 : vector<4x9x16xf32> to vector<4x9x16xbf16>
      %c0_78 = arith.constant 0 : index
      %c1_79 = arith.constant 1 : index
      %c1_80 = arith.constant 1 : index
      %78 = vector.load %arg6[%c0_78, %c1_79, %c1_80] : memref<4x10x18xbf16, #tpu.memory_space<vmem>>, vector<4x9x16xbf16>
      tpu.vector_store %arg6[%c0_78, %c1_79, %c1_80], %77 {strides = array<i32>} : memref<4x10x18xbf16, #tpu.memory_space<vmem>>, vector<4x9x16xbf16>,
    } else {
    }
    %c1_i32 = arith.constant 1 : i32
    %5 = arith.cmpi eq, %arg1, %c1_i32 : i32
    %6 = arith.extui %5 : i1 to i32
    %c0_i32_3 = arith.constant 0 : i32
    %7 = arith.cmpi ne, %6, %c0_i32_3 : i32
    scf.if %7 {
      %c0_74 = arith.constant 0 : index
      %c0_75 = arith.constant 0 : index
      %c7 = arith.constant 7 : index
      %c0_76 = arith.constant 0 : index
      %75 = vector.load %arg2[%c0_74, %c0_75, %c7, %c0_76] : memref<1x4x16x16xf32, #tpu.memory_space<vmem>>, vector<1x4x9x16xf32>
      %76 = vector.shape_cast %75 : vector<1x4x9x16xf32> to vector<4x9x16xf32>
      %77 = arith.truncf %76 : vector<4x9x16xf32> to vector<4x9x16xbf16>
      %c0_77 = arith.constant 0 : index
      %c0_78 = arith.constant 0 : index
      %c1_79 = arith.constant 1 : index
      %78 = vector.load %arg6[%c0_77, %c0_78, %c1_79] : memref<4x10x18xbf16, #tpu.memory_space<vmem>>, vector<4x9x16xbf16>
      tpu.vector_store %arg6[%c0_77, %c0_78, %c1_79], %77 {strides = array<i32>} : memref<4x10x18xbf16, #tpu.memory_space<vmem>>, vector<4x9x16xbf16>,
    } else {
    }
    %c0_i32_4 = arith.constant 0 : i32
    %8 = arith.cmpi sgt, %arg1, %c0_i32_4 : i32
    %c1_i32_5 = arith.constant 1 : i32
    %9 = arith.cmpi slt, %arg1, %c1_i32_5 : i32
    %10 = arith.andi %8, %9 : i1
    %11 = arith.extui %10 : i1 to i32
    %c0_i32_6 = arith.constant 0 : i32
    %12 = arith.cmpi ne, %11, %c0_i32_6 : i32
    scf.if %12 {
      %c8_i32 = arith.constant 8 : i32
      %75 = arith.muli %arg1, %c8_i32 : i32
      %c1_i32_74 = arith.constant 1 : i32
      %76 = arith.subi %75, %c1_i32_74 : i32
      %c0_75 = arith.constant 0 : index
      %c0_76 = arith.constant 0 : index
      %77 = arith.index_cast %76 : i32 to index
      %c0_77 = arith.constant 0 : index
      %78 = vector.load %arg2[%c0_75, %c0_76, %77, %c0_77] : memref<1x4x16x16xf32, #tpu.memory_space<vmem>>, vector<1x4x10x16xf32>
      %79 = vector.shape_cast %78 : vector<1x4x10x16xf32> to vector<4x10x16xf32>
      %80 = arith.truncf %79 : vector<4x10x16xf32> to vector<4x10x16xbf16>
      %c0_78 = arith.constant 0 : index
      %c0_79 = arith.constant 0 : index
      %c1_80 = arith.constant 1 : index
      %81 = vector.load %arg6[%c0_78, %c0_79, %c1_80] : memref<4x10x18xbf16, #tpu.memory_space<vmem>>, vector<4x10x16xbf16>
      tpu.vector_store %arg6[%c0_78, %c0_79, %c1_80], %80 {strides = array<i32>} : memref<4x10x18xbf16, #tpu.memory_space<vmem>>, vector<4x10x16xbf16>,
    } else {
    }
    %c0_7 = arith.constant 0 : index
    %c0_8 = arith.constant 0 : index
    %c0_9 = arith.constant 0 : index
    %13 = vector.load %arg6[%c0_7, %c0_8, %c0_9] : memref<4x10x18xbf16, #tpu.memory_space<vmem>>, vector<4x8x16xbf16>
    %14 = vector.shape_cast %13 : vector<4x8x16xbf16> to vector<4x128xbf16>
    %c0_10 = arith.constant 0 : index
    %c0_11 = arith.constant 0 : index
    %15 = vector.load %arg7[%c0_10, %c0_11] : memref<72x128xbf16, #tpu.memory_space<vmem>>, vector<4x128xbf16>
    tpu.vector_store %arg7[%c0_10, %c0_11], %14 {strides = array<i32>} : memref<72x128xbf16, #tpu.memory_space<vmem>>, vector<4x128xbf16>,
    %cst_12 = arith.constant 0.000000e+00 : bf16
    %16 = vector.broadcast %cst_12 : bf16 to vector<4x128xbf16>
    %c4 = arith.constant 4 : index
    %c0_13 = arith.constant 0 : index
    %17 = vector.load %arg7[%c4, %c0_13] : memref<72x128xbf16, #tpu.memory_space<vmem>>, vector<4x128xbf16>
    tpu.vector_store %arg7[%c4, %c0_13], %16 {strides = array<i32>} : memref<72x128xbf16, #tpu.memory_space<vmem>>, vector<4x128xbf16>,
    %c0_14 = arith.constant 0 : index
    %c0_15 = arith.constant 0 : index
    %c1 = arith.constant 1 : index
    %18 = vector.load %arg6[%c0_14, %c0_15, %c1] : memref<4x10x18xbf16, #tpu.memory_space<vmem>>, vector<4x8x16xbf16>
    %19 = vector.shape_cast %18 : vector<4x8x16xbf16> to vector<4x128xbf16>
    %c8 = arith.constant 8 : index
    %c0_16 = arith.constant 0 : index
    %20 = vector.load %arg7[%c8, %c0_16] : memref<72x128xbf16, #tpu.memory_space<vmem>>, vector<4x128xbf16>
    tpu.vector_store %arg7[%c8, %c0_16], %19 {strides = array<i32>} : memref<72x128xbf16, #tpu.memory_space<vmem>>, vector<4x128xbf16>,
    %cst_17 = arith.constant 0.000000e+00 : bf16
    %21 = vector.broadcast %cst_17 : bf16 to vector<4x128xbf16>
    %c12 = arith.constant 12 : index
    %c0_18 = arith.constant 0 : index
    %22 = vector.load %arg7[%c12, %c0_18] : memref<72x128xbf16, #tpu.memory_space<vmem>>, vector<4x128xbf16>
    tpu.vector_store %arg7[%c12, %c0_18], %21 {strides = array<i32>} : memref<72x128xbf16, #tpu.memory_space<vmem>>, vector<4x128xbf16>,
    %c0_19 = arith.constant 0 : index
    %c0_20 = arith.constant 0 : index
    %c2 = arith.constant 2 : index
    %23 = vector.load %arg6[%c0_19, %c0_20, %c2] : memref<4x10x18xbf16, #tpu.memory_space<vmem>>, vector<4x8x16xbf16>
    %24 = vector.shape_cast %23 : vector<4x8x16xbf16> to vector<4x128xbf16>
    %c16 = arith.constant 16 : index
    %c0_21 = arith.constant 0 : index
    %25 = vector.load %arg7[%c16, %c0_21] : memref<72x128xbf16, #tpu.memory_space<vmem>>, vector<4x128xbf16>
    tpu.vector_store %arg7[%c16, %c0_21], %24 {strides = array<i32>} : memref<72x128xbf16, #tpu.memory_space<vmem>>, vector<4x128xbf16>,
    %cst_22 = arith.constant 0.000000e+00 : bf16
    %26 = vector.broadcast %cst_22 : bf16 to vector<4x128xbf16>
    %c20 = arith.constant 20 : index
    %c0_23 = arith.constant 0 : index
    %27 = vector.load %arg7[%c20, %c0_23] : memref<72x128xbf16, #tpu.memory_space<vmem>>, vector<4x128xbf16>
    tpu.vector_store %arg7[%c20, %c0_23], %26 {strides = array<i32>} : memref<72x128xbf16, #tpu.memory_space<vmem>>, vector<4x128xbf16>,
    %c0_24 = arith.constant 0 : index
    %c1_25 = arith.constant 1 : index
    %c0_26 = arith.constant 0 : index
    %28 = vector.load %arg6[%c0_24, %c1_25, %c0_26] : memref<4x10x18xbf16, #tpu.memory_space<vmem>>, vector<4x8x16xbf16>
    %29 = vector.shape_cast %28 : vector<4x8x16xbf16> to vector<4x128xbf16>
    %c24 = arith.constant 24 : index
    %c0_27 = arith.constant 0 : index
    %30 = vector.load %arg7[%c24, %c0_27] : memref<72x128xbf16, #tpu.memory_space<vmem>>, vector<4x128xbf16>
    tpu.vector_store %arg7[%c24, %c0_27], %29 {strides = array<i32>} : memref<72x128xbf16, #tpu.memory_space<vmem>>, vector<4x128xbf16>,
    %cst_28 = arith.constant 0.000000e+00 : bf16
    %31 = vector.broadcast %cst_28 : bf16 to vector<4x128xbf16>
    %c28 = arith.constant 28 : index
    %c0_29 = arith.constant 0 : index
    %32 = vector.load %arg7[%c28, %c0_29] : memref<72x128xbf16, #tpu.memory_space<vmem>>, vector<4x128xbf16>
    tpu.vector_store %arg7[%c28, %c0_29], %31 {strides = array<i32>} : memref<72x128xbf16, #tpu.memory_space<vmem>>, vector<4x128xbf16>,
    %c0_30 = arith.constant 0 : index
    %c1_31 = arith.constant 1 : index
    %c1_32 = arith.constant 1 : index
    %33 = vector.load %arg6[%c0_30, %c1_31, %c1_32] : memref<4x10x18xbf16, #tpu.memory_space<vmem>>, vector<4x8x16xbf16>
    %34 = vector.shape_cast %33 : vector<4x8x16xbf16> to vector<4x128xbf16>
    %c32 = arith.constant 32 : index
    %c0_33 = arith.constant 0 : index
    %35 = vector.load %arg7[%c32, %c0_33] : memref<72x128xbf16, #tpu.memory_space<vmem>>, vector<4x128xbf16>
    tpu.vector_store %arg7[%c32, %c0_33], %34 {strides = array<i32>} : memref<72x128xbf16, #tpu.memory_space<vmem>>, vector<4x128xbf16>,
    %cst_34 = arith.constant 0.000000e+00 : bf16
    %36 = vector.broadcast %cst_34 : bf16 to vector<4x128xbf16>
    %c36 = arith.constant 36 : index
    %c0_35 = arith.constant 0 : index
    %37 = vector.load %arg7[%c36, %c0_35] : memref<72x128xbf16, #tpu.memory_space<vmem>>, vector<4x128xbf16>
    tpu.vector_store %arg7[%c36, %c0_35], %36 {strides = array<i32>} : memref<72x128xbf16, #tpu.memory_space<vmem>>, vector<4x128xbf16>,
    %c0_36 = arith.constant 0 : index
    %c1_37 = arith.constant 1 : index
    %c2_38 = arith.constant 2 : index
    %38 = vector.load %arg6[%c0_36, %c1_37, %c2_38] : memref<4x10x18xbf16, #tpu.memory_space<vmem>>, vector<4x8x16xbf16>
    %39 = vector.shape_cast %38 : vector<4x8x16xbf16> to vector<4x128xbf16>
    %c40 = arith.constant 40 : index
    %c0_39 = arith.constant 0 : index
    %40 = vector.load %arg7[%c40, %c0_39] : memref<72x128xbf16, #tpu.memory_space<vmem>>, vector<4x128xbf16>
    tpu.vector_store %arg7[%c40, %c0_39], %39 {strides = array<i32>} : memref<72x128xbf16, #tpu.memory_space<vmem>>, vector<4x128xbf16>,
    %cst_40 = arith.constant 0.000000e+00 : bf16
    %41 = vector.broadcast %cst_40 : bf16 to vector<4x128xbf16>
    %c44 = arith.constant 44 : index
    %c0_41 = arith.constant 0 : index
    %42 = vector.load %arg7[%c44, %c0_41] : memref<72x128xbf16, #tpu.memory_space<vmem>>, vector<4x128xbf16>
    tpu.vector_store %arg7[%c44, %c0_41], %41 {strides = array<i32>} : memref<72x128xbf16, #tpu.memory_space<vmem>>, vector<4x128xbf16>,
    %c0_42 = arith.constant 0 : index
    %c2_43 = arith.constant 2 : index
    %c0_44 = arith.constant 0 : index
    %43 = vector.load %arg6[%c0_42, %c2_43, %c0_44] : memref<4x10x18xbf16, #tpu.memory_space<vmem>>, vector<4x8x16xbf16>
    %44 = vector.shape_cast %43 : vector<4x8x16xbf16> to vector<4x128xbf16>
    %c48 = arith.constant 48 : index
    %c0_45 = arith.constant 0 : index
    %45 = vector.load %arg7[%c48, %c0_45] : memref<72x128xbf16, #tpu.memory_space<vmem>>, vector<4x128xbf16>
    tpu.vector_store %arg7[%c48, %c0_45], %44 {strides = array<i32>} : memref<72x128xbf16, #tpu.memory_space<vmem>>, vector<4x128xbf16>,
    %cst_46 = arith.constant 0.000000e+00 : bf16
    %46 = vector.broadcast %cst_46 : bf16 to vector<4x128xbf16>
    %c52 = arith.constant 52 : index
    %c0_47 = arith.constant 0 : index
    %47 = vector.load %arg7[%c52, %c0_47] : memref<72x128xbf16, #tpu.memory_space<vmem>>, vector<4x128xbf16>
    tpu.vector_store %arg7[%c52, %c0_47], %46 {strides = array<i32>} : memref<72x128xbf16, #tpu.memory_space<vmem>>, vector<4x128xbf16>,
    %c0_48 = arith.constant 0 : index
    %c2_49 = arith.constant 2 : index
    %c1_50 = arith.constant 1 : index
    %48 = vector.load %arg6[%c0_48, %c2_49, %c1_50] : memref<4x10x18xbf16, #tpu.memory_space<vmem>>, vector<4x8x16xbf16>
    %49 = vector.shape_cast %48 : vector<4x8x16xbf16> to vector<4x128xbf16>
    %c56 = arith.constant 56 : index
    %c0_51 = arith.constant 0 : index
    %50 = vector.load %arg7[%c56, %c0_51] : memref<72x128xbf16, #tpu.memory_space<vmem>>, vector<4x128xbf16>
    tpu.vector_store %arg7[%c56, %c0_51], %49 {strides = array<i32>} : memref<72x128xbf16, #tpu.memory_space<vmem>>, vector<4x128xbf16>,
    %cst_52 = arith.constant 0.000000e+00 : bf16
    %51 = vector.broadcast %cst_52 : bf16 to vector<4x128xbf16>
    %c60 = arith.constant 60 : index
    %c0_53 = arith.constant 0 : index
    %52 = vector.load %arg7[%c60, %c0_53] : memref<72x128xbf16, #tpu.memory_space<vmem>>, vector<4x128xbf16>
    tpu.vector_store %arg7[%c60, %c0_53], %51 {strides = array<i32>} : memref<72x128xbf16, #tpu.memory_space<vmem>>, vector<4x128xbf16>,
    %c0_54 = arith.constant 0 : index
    %c2_55 = arith.constant 2 : index
    %c2_56 = arith.constant 2 : index
    %53 = vector.load %arg6[%c0_54, %c2_55, %c2_56] : memref<4x10x18xbf16, #tpu.memory_space<vmem>>, vector<4x8x16xbf16>
    %54 = vector.shape_cast %53 : vector<4x8x16xbf16> to vector<4x128xbf16>
    %c64 = arith.constant 64 : index
    %c0_57 = arith.constant 0 : index
    %55 = vector.load %arg7[%c64, %c0_57] : memref<72x128xbf16, #tpu.memory_space<vmem>>, vector<4x128xbf16>
    tpu.vector_store %arg7[%c64, %c0_57], %54 {strides = array<i32>} : memref<72x128xbf16, #tpu.memory_space<vmem>>, vector<4x128xbf16>,
    %cst_58 = arith.constant 0.000000e+00 : bf16
    %56 = vector.broadcast %cst_58 : bf16 to vector<4x128xbf16>
    %c68 = arith.constant 68 : index
    %c0_59 = arith.constant 0 : index
    %57 = vector.load %arg7[%c68, %c0_59] : memref<72x128xbf16, #tpu.memory_space<vmem>>, vector<4x128xbf16>
    tpu.vector_store %arg7[%c68, %c0_59], %56 {strides = array<i32>} : memref<72x128xbf16, #tpu.memory_space<vmem>>, vector<4x128xbf16>,
    %c0_60 = arith.constant 0 : index
    %c0_61 = arith.constant 0 : index
    %58 = vector.load %arg3[%c0_60, %c0_61] : memref<8x72xbf16, #tpu.memory_space<vmem>>, vector<8x72xbf16>
    %c0_62 = arith.constant 0 : index
    %c0_63 = arith.constant 0 : index
    %59 = vector.load %arg7[%c0_62, %c0_63] : memref<72x128xbf16, #tpu.memory_space<vmem>>, vector<72x128xbf16>
    %cst_64 = arith.constant dense<0.000000e+00> : vector<8x128xf32>
    %60 = tpu.matmul %58, %59, %cst_64 {dimension_numbers = #tpu.dot_dimension_numbers<[1], [0], [0], [1], [0, 0, 1, 1], [], []>} : vector<8x72xbf16>, vector<72x128xbf16>, vector<8x128xf32> -> vector<8x128xf32>
    %c0_65 = arith.constant 0 : index
    %c0_66 = arith.constant 0 : index
    %61 = vector.load %arg4[%c0_65, %c0_66] : memref<8x1xf32, #tpu.memory_space<vmem>>, vector<8x1xf32>
    %62 = vector.broadcast %61 : vector<8x1xf32> to vector<8x128xf32>
    %63 = arith.addf %60, %62 : vector<8x128xf32>
    %cst_67 = arith.constant 3.000000e+00 : f32
    %64 = vector.broadcast %cst_67 : f32 to vector<8x128xf32>
    %65 = arith.addf %63, %64 : vector<8x128xf32>
    %cst_68 = arith.constant 0.000000e+00 : f32
    %cst_69 = arith.constant 6.000000e+00 : f32
    %66 = vector.broadcast %cst_68 : f32 to vector<8x128xf32>
    %67 = arith.maximumf %66, %65 : vector<8x128xf32>
    %68 = vector.broadcast %cst_69 : f32 to vector<8x128xf32>
    %69 = arith.minimumf %68, %67 : vector<8x128xf32>
    %70 = arith.mulf %63, %69 : vector<8x128xf32>
    %cst_70 = arith.constant 0.166666672 : f32
    %71 = vector.broadcast %cst_70 : f32 to vector<8x128xf32>
    %72 = arith.mulf %70, %71 : vector<8x128xf32>
    %73 = vector.shape_cast %72 : vector<8x128xf32> to vector<1x8x128xf32>
    %c0_71 = arith.constant 0 : index
    %c0_72 = arith.constant 0 : index
    %c0_73 = arith.constant 0 : index
    %74 = vector.load %arg5[%c0_71, %c0_72, %c0_73] : memref<1x8x128xf32, #tpu.memory_space<vmem>>, vector<1x8x128xf32>
    tpu.vector_store %arg5[%c0_71, %c0_72, %c0_73], %73 {strides = array<i32>} : memref<1x8x128xf32, #tpu.memory_space<vmem>>, vector<1x8x128xf32>,
    return
  }
  func.func @transform_0(%arg0: i32, %arg1: i32) -> (i32, i32, i32, i32) {
    %c0_i32 = arith.constant 0 : i32
    %c0_i32_0 = arith.constant 0 : i32
    %c0_i32_1 = arith.constant 0 : i32
    %c0_i32_2 = arith.constant 0 : i32
    return %arg0, %c0_i32, %c0_i32_0, %c0_i32_1 : i32, i32, i32, i32
  }
  func.func @transform_1(%arg0: i32, %arg1: i32) -> (i32, i32) {
    %c0_i32 = arith.constant 0 : i32
    %c0_i32_0 = arith.constant 0 : i32
    %c0_i32_1 = arith.constant 0 : i32
    return %c0_i32, %c0_i32_0 : i32, i32
  }
  func.func @transform_2(%arg0: i32, %arg1: i32) -> (i32, i32) {
    %c0_i32 = arith.constant 0 : i32
    %c0_i32_0 = arith.constant 0 : i32
    %c0_i32_1 = arith.constant 0 : i32
    return %c0_i32, %c0_i32_0 : i32, i32
  }
  func.func @transform_3(%arg0: i32, %arg1: i32) -> (i32, i32, i32) {
    %c0_i32 = arith.constant 0 : i32
    %c0_i32_0 = arith.constant 0 : i32
    return %arg0, %c0_i32, %arg1 : i32, i32, i32
  }
}

</mosaic_0001>

<llo_original>
// kernel: tpu_custom_call.1
$region0: #{tpu_custom_call.1}
  #allocation0 [shape = 'u32[]', space=smem, size = 0x4, offset = 0x4, fixed_abs, tag = 'smem constant byte address 0x4 - core index']
  #allocation1 [shape = 'u32[144,128]{1,0:T(1,128)}', space=vmem, size = 0x12000, scoped, tag = 'internal scratch']
  #allocation2 [shape = 'bf16[4,10,18]{2,1,0:T(8,128)(2,1)}', space=vmem, size = 0x4000, scoped, tag = 'scratch operand']
  #allocation3 [shape = 'bf16[72,128]{1,0:T(8,128)(2,1)}', space=vmem, size = 0x4800, scoped, tag = 'scratch operand']
  %s0 = inlined_call_operand.hbm [shape: f32[2,4,16,16], index: 0, kind: input, shape index: {}]
  %s1 = inlined_call_operand.vmem [shape: bf16[8,72], index: 1, kind: input, shape index: {}]
  %s2 = inlined_call_operand.vmem [shape: f32[8,1], index: 2, kind: input, shape index: {}]
  %s3 = inlined_call_operand.hbm [shape: f32[2,8,256], index: 3, kind: output, shape index: {}]
  %s4 = sld [smem:[#allocation0]]
  $region61: #{tpu_custom_call.1} parent=0
    _
  %s6 = ssub.s32 1, %s4
  %s7 = scalar_select 0, %s6, %s4
  $region1: #{tpu_custom_call.1} parent=0
    #allocation4 [shape = 'u8[65536]{0}', space=vmem, size = 0x10000, scoped, tag = 'input window, operand 0']
    #allocation5 [shape = 's32[2]{0}', space=sflag, size = 0x8, scoped, tag = 'scoped memory for tpu_custom_call.1']
    #allocation6 [shape = 's32[2]{0}', space=sflag, size = 0x8, scoped, tag = 'scoped memory for tpu_custom_call.1']
    #allocation7 [shape = 'u8[8192]{0}', space=vmem, size = 0x2000, scoped, tag = 'output window, operand 0']
    %8 = vsyncpa [#allocation5], 0
    %s9 = scalar_lea.sflag [#allocation5], 1
    %10 = vsyncpa %s9, 0
    %11 = vsyncpa [#allocation6], 0
    %s12 = scalar_lea.sflag [#allocation6], 1
    %13 = vsyncpa %s12, 0
    loop: start=0, step=1, limit=6
    $region2: #{tpu_custom_call.1} parent=1 // loop_pre_header
      _
    $region3: #{tpu_custom_call.1} parent=1 // loop_header
      %s15 = sphi 0, %s19
      %p16 = scmp.ge.s32.totalorder %s15, 6
      %s22 = sphi 0, %s34
      %s23 = sphi 0, %s30
      %s24 = sphi 0, %s22
      %s25 = sphi 0, %s23
      %s26 = sphi 0, %s24
      %s27 = sphi 0, %s25
      %s37 = sphi 0, %s39
      %s40 = sphi 0, %s37
      %s41 = sphi 0, %s40
      %s57 = sphi 0, %s41
      %s61 = sphi 0, %s61
      %s63 = sphi 0, %s61
      %s64 = sphi 0, %s63
      %s78 = sphi 0, %s64
      %s82 = sphi 0, %s82
      %s84 = sphi 0, %s82
      %s85 = sphi 0, %s84
      %s99 = sphi 0, %s85
      %s107 = sphi 0, %s109
      %s110 = sphi 0, %s107
      %s111 = sphi 0, %s110
      %s127 = sphi 0, %s111
    $region4: #{tpu_custom_call.1} parent=1 // loop_header_branch
      %18 = sbr.rel (%p16) target = $region8
    $region5: #{tpu_custom_call.1} parent=1 // loop_body
      %s20 = ssub.s32 %s15, 1
      %s21 = ssub.s32 %s15, 2
      %s28 = sadd.s32 1, %s23
      %p29 = scmp.ge.s32.totalorder %s28, 2
      %s30 = scalar_select %p29, 0, %s28
      %s31 = sadd.s32 1, %s22
      %s32 = scalar_select %p29, %s31, %s22
      %p33 = scmp.ge.s32.totalorder %s32, 2
      %s34 = scalar_select %p33, 0, %s32
      %s35 = ssub.s32 %s22, %s34
      %p36 = scmp.eq.s32.totalorder %s35, 0
      %s38 = sadd.s32 %s37, 1
      %s39 = scalar_select %p36, %s37, %s38
      %p42 = pneg %p36
      %p43 = scmp.eq.s32.totalorder %s15, 3
      %p44 = por %p42, %p43
      %p45 = scmp.ne.s32.totalorder %s37, %s40
      %p46 = scmp.eq.s32.totalorder %s15, 0
      %p47 = por %p45, %p46
      %p48 = scmp.ne.s32.totalorder %s37, %s40
      %p49 = scmp.eq.s32.totalorder %s20, 3
      %p50 = por %p48, %p49
      %p51 = scmp.ne.s32.totalorder %s40, %s41
      %p52 = scmp.eq.s32.totalorder %s20, 0
      %p53 = por %p51, %p52
      %p54 = scmp.ne.s32.totalorder %s40, %s41
      %p55 = scmp.eq.s32.totalorder %s21, 3
      %p56 = por %p54, %p55
      %p58 = scmp.ne.s32.totalorder %s41, %s57
      %p59 = scmp.eq.s32.totalorder %s21, 0
      %p60 = por %p58, %p59
      %s62 = sadd.s32 %s61, 1
      %p65 = scmp.eq.s32.totalorder %s15, 3
      %p66 = scmp.ne.s32.totalorder %s61, %s63
      %p67 = scmp.eq.s32.totalorder %s15, 0
      %p68 = por %p66, %p67
      %p69 = scmp.ne.s32.totalorder %s61, %s63
      %p70 = scmp.eq.s32.totalorder %s20, 3
      %p71 = por %p69, %p70
      %p72 = scmp.ne.s32.totalorder %s63, %s64
      %p73 = scmp.eq.s32.totalorder %s20, 0
      %p74 = por %p72, %p73
      %p75 = scmp.ne.s32.totalorder %s63, %s64
      %p76 = scmp.eq.s32.totalorder %s21, 3
      %p77 = por %p75, %p76
      %p79 = scmp.ne.s32.totalorder %s64, %s78
      %p80 = scmp.eq.s32.totalorder %s21, 0
      %p81 = por %p79, %p80
      %s83 = sadd.s32 %s82, 1
      %p86 = scmp.eq.s32.totalorder %s15, 3
      %p87 = scmp.ne.s32.totalorder %s82, %s84
      %p88 = scmp.eq.s32.totalorder %s15, 0
      %p89 = por %p87, %p88
      %p90 = scmp.ne.s32.totalorder %s82, %s84
      %p91 = scmp.eq.s32.totalorder %s20, 3
      %p92 = por %p90, %p91
      %p93 = scmp.ne.s32.totalorder %s84, %s85
      %p94 = scmp.eq.s32.totalorder %s20, 0
      %p95 = por %p93, %p94
      %p96 = scmp.ne.s32.totalorder %s84, %s85
      %p97 = scmp.eq.s32.totalorder %s21, 3
      %p98 = por %p96, %p97
      %p100 = scmp.ne.s32.totalorder %s85, %s99
      %p101 = scmp.eq.s32.totalorder %s21, 0
      %p102 = por %p100, %p101
      %s103 = ssub.s32 %s22, %s34
      %s104 = ssub.s32 %s23, %s30
      %s105 = sor.u32 %s103, %s104
      %p106 = scmp.eq.s32.totalorder %s105, 0
      %s108 = sadd.s32 %s107, 1
      %s109 = scalar_select %p106, %s107, %s108
      %p112 = pneg %p106
      %p113 = scmp.eq.s32.totalorder %s15, 3
      %p114 = por %p112, %p113
      %p115 = scmp.ne.s32.totalorder %s107, %s110
      %p116 = scmp.eq.s32.totalorder %s15, 0
      %p117 = por %p115, %p116
      %p118 = scmp.ne.s32.totalorder %s107, %s110
      %p119 = scmp.eq.s32.totalorder %s20, 3
      %p120 = por %p118, %p119
      %p121 = scmp.ne.s32.totalorder %s110, %s111
      %p122 = scmp.eq.s32.totalorder %s20, 0
      %p123 = por %p121, %p122
      %p124 = scmp.ne.s32.totalorder %s110, %s111
      %p125 = scmp.eq.s32.totalorder %s21, 3
      %p126 = por %p124, %p125
      %p128 = scmp.ne.s32.totalorder %s111, %s127
      %p129 = scmp.eq.s32.totalorder %s21, 0
      %p130 = por %p128, %p129
      %p131 = scmp.le.s32.totalorder 1, %s15
      %p132 = scmp.lt.s32.totalorder %s15, 5
      %p133 = pnand %p131, %p132
      %p134 = pneg %p133
      // Predicated region
      $region9: #{tpu_custom_call.1} parent=5 // pred_check
        _
      $region10: #{tpu_custom_call.1} parent=5 // pred_check_branch
        %136 = sbr.rel (%p133) target = $region12
      $region11: #{tpu_custom_call.1} parent=5 // pred_region
        %s137 = ssub.s32 %s15, 1
        // Predicated region
        $region13: #{tpu_custom_call.1} parent=11 // pred_check
          %p138 = pneg %p74
        $region14: #{tpu_custom_call.1} parent=11 // pred_check_branch
          %140 = sbr.rel (%p138) target = $region16
        $region15: #{tpu_custom_call.1} parent=11 // pred_region
          _
        $region16: #{tpu_custom_call.1} parent=11 // pred_fallthru
          _
        // Predicated region
        $region17: #{tpu_custom_call.1} parent=11 // pred_check
          %p141 = pneg %p95
        $region18: #{tpu_custom_call.1} parent=11 // pred_check_branch
          %143 = sbr.rel (%p141) target = $region20
        $region19: #{tpu_custom_call.1} parent=11 // pred_region
          _
        $region20: #{tpu_custom_call.1} parent=11 // pred_fallthru
          _
      $region12: #{tpu_custom_call.1} parent=5 // pred_fallthru
        _
      %p144 = scmp.lt.s32.totalorder %s15, 4
      // Predicated region
      $region21: #{tpu_custom_call.1} parent=5 // pred_check
        %p145 = pneg %p144
      $region22: #{tpu_custom_call.1} parent=5 // pred_check_branch
        %147 = sbr.rel (%p145) target = $region24
      $region23: #{tpu_custom_call.1} parent=5 // pred_region
        // Predicated region
        $region25: #{tpu_custom_call.1} parent=23 // pred_check
          %p148 = pneg %p47
        $region26: #{tpu_custom_call.1} parent=23 // pred_check_branch
          %150 = sbr.rel (%p148) target = $region28
        $region27: #{tpu_custom_call.1} parent=23 // pred_region
          %s151 = sand.u32 %s37, 1
          %s152 = scalar_lea.sflag [#allocation5], %s151
          %s153 = sand.u32 %s37, 1
          %s154 = smul.addr %s153, 64
          %s155 = scalar_lea.vmem [#allocation4], %s154
          %s157 = ssub.s32 1024, 1024
          %158 = vsyncadd %s152, %s157
          %s159 = smul.addr %s22, 8
          %s160 = smul.addr %s159, 128
          %s161 = scalar_lea.hbm %s0, %s160
          %s162 = sshll.u32 %s155, 4
          %s163 = int_to_ptr.vmem [resolvable:$true] %s162
          %168 = dma.hbm_to_vmem [thread:$0]  %s161, 1024, %s163, %s152, 128, 128, 8
        $region28: #{tpu_custom_call.1} parent=23 // pred_fallthru
          _
      $region24: #{tpu_custom_call.1} parent=5 // pred_fallthru
        _
      %p169 = scmp.le.s32.totalorder 1, %s15
      %p170 = scmp.lt.s32.totalorder %s15, 5
      %p171 = pnand %p169, %p170
      %p172 = pneg %p171
      // Predicated region
      $region29: #{tpu_custom_call.1} parent=5 // pred_check
        _
      $region30: #{tpu_custom_call.1} parent=5 // pred_check_branch
        %174 = sbr.rel (%p171) target = $region32
      $region31: #{tpu_custom_call.1} parent=5 // pred_region
        %s175 = ssub.s32 %s15, 1
        %s176 = sand.u32 %s40, 1
        %s177 = scalar_lea.sflag [#allocation5], %s176
        %s178 = sand.u32 %s40, 1
        %s179 = smul.addr %s178, 64
        %s180 = scalar_lea.vmem [#allocation4], %s179
        // Predicated region
        $region33: #{tpu_custom_call.1} parent=31 // pred_check
          %p181 = pneg %p53
        $region34: #{tpu_custom_call.1} parent=31 // pred_check_branch
          %183 = sbr.rel (%p181) target = $region36
        $region35: #{tpu_custom_call.1} parent=31 // pred_region
          %184 = dma.done %s177, 1024
        $region36: #{tpu_custom_call.1} parent=31 // pred_fallthru
          _
        %s185 = sand.u32 %s40, 1
        %s186 = scalar_lea.sflag [#allocation5], %s185
        %s187 = sand.u32 %s40, 1
        %s188 = smul.addr %s187, 64
        %s189 = scalar_lea.vmem [#allocation4], %s188
        %p190 = pneg %p53
        %p191 = pneg %p50
        %p192 = pneg %p74
        %p193 = pneg %p71
        %p194 = pneg %p95
        %p195 = pneg %p92
        %p196 = pneg %p123
        %p197 = pneg %p120
        %s198 = sand.u32 %s110, 1
        %s199 = scalar_lea.sflag [#allocation6], %s198
        %s200 = sand.u32 %s110, 1
        %s201 = smul.addr %s200, 8
        %s202 = scalar_lea.vmem [#allocation7], %s201
        %vm204 = vcmask 142336
        %205 = vst.msk [vmem:[#allocation2] sm:$0xf] %vm204, 0
        %vm206 = vcmask 139264
        %207 = vst.msk [vmem:[#allocation2 + $0x4] sm:$0x1] %vm206, 0
        %208 = vst.msk [vmem:[#allocation2 + $0x8] sm:$0xf] %vm204, 0
        %209 = vst.msk [vmem:[#allocation2 + $0xc] sm:$0x1] %vm206, 0
        %210 = vst.msk [vmem:[#allocation2 + $0x10] sm:$0xf] %vm204, 0
        %211 = vst.msk [vmem:[#allocation2 + $0x14] sm:$0x1] %vm206, 0
        %212 = vst.msk [vmem:[#allocation2 + $0x18] sm:$0xf] %vm204, 0
        %213 = vst.msk [vmem:[#allocation2 + $0x1c] sm:$0x1] %vm206, 0
        %p214 = scmp.eq.s32.totalorder %s25, 0
        // Predicated region
        $region37: #{tpu_custom_call.1} parent=31 // pred_check
          %p215 = pneg %p214
        $region38: #{tpu_custom_call.1} parent=31 // pred_check_branch
          %217 = sbr.rel (%p215) target = $region40
        $region39: #{tpu_custom_call.1} parent=31 // pred_region
          %v218 = vld [vmem:[%s180] sm:$0xff]
          %v219 = vld [vmem:[%s180 + $0x8] sm:$0x1]
          %v220 = vld [vmem:[%s180 + $0x10] sm:$0xff]
          %v221 = vld [vmem:[%s180 + $0x18] sm:$0x1]
          %v222 = vld [vmem:[%s180 + $0x20] sm:$0xff]
          %v223 = vld [vmem:[%s180 + $0x28] sm:$0x1]
          %v224 = vld [vmem:[%s180 + $0x30] sm:$0xff]
          %v225 = vld [vmem:[%s180 + $0x38] sm:$0x1]
          %v226 = vpack.c.bf16 %v219, %v218
          %v227 = vpack.c.bf16 %v221, %v220
          %v228 = vpack.c.bf16 %v223, %v222
          %v229 = vpack.c.bf16 %v225, %v224
          %v234 = vunpack.c.l.b16 %v226
          %v235 = vunpack.c.h.b16 %v226
          %v236 = vunpack.c.l.b16 %v227
          %v237 = vunpack.c.h.b16 %v227
          %v238 = vunpack.c.l.b16 %v228
          %v239 = vunpack.c.h.b16 %v228
          %v240 = vunpack.c.l.b16 %v229
          %v241 = vunpack.c.h.b16 %v229
          %v242 = vpack.c.b16 %v234, %v234
          %v243 = vpack.c.b16 %v235, %v235
          %v244 = vpack.c.b16 %v236, %v236
          %v245 = vpack.c.b16 %v237, %v237
          %v246 = vpack.c.b16 %v238, %v238
          %v247 = vpack.c.b16 %v239, %v239
          %v248 = vpack.c.b16 %v240, %v240
          %v249 = vpack.c.b16 %v241, %v241
          %vm250 = vsmask.f32 256
          %vm251 = vsmask.f32 4368
          %vm252 = vmor %vm250, %vm251
          %v254 = vshrl.u32 %v242, 16
          %v256 = vrot.slane %v254, 7
          %v257 = vshll.u32 %v242, 16
          %v259 = vor.u32 %v256, %v257
          %v260 = vrot.slane %v256, 4
          %v262 = vshll.u32 %v243, 16
          %v264 = vsel %vm252, %v260, %v262
          %v266 = vshrl.u32 %v244, 16
          %v268 = vrot.slane %v266, 7
          %v269 = vshll.u32 %v244, 16
          %v271 = vor.u32 %v268, %v269
          %v272 = vrot.slane %v268, 4
          %v274 = vshll.u32 %v245, 16
          %v276 = vsel %vm252, %v272, %v274
          %v278 = vshrl.u32 %v246, 16
          %v280 = vrot.slane %v278, 7
          %v281 = vshll.u32 %v246, 16
          %v283 = vor.u32 %v280, %v281
          %v284 = vrot.slane %v280, 4
          %v286 = vshll.u32 %v247, 16
          %v288 = vsel %vm252, %v284, %v286
          %v290 = vshrl.u32 %v248, 16
          %v292 = vrot.slane %v290, 7
          %v293 = vshll.u32 %v248, 16
          %v295 = vor.u32 %v292, %v293
          %v296 = vrot.slane %v292, 4
          %v298 = vshll.u32 %v249, 16
          %v300 = vsel %vm252, %v296, %v298
          %301 = vrot.lane.b32.xlu0 %v259, 1
          %v302 = vpop.permute.xlu0 %301
          %303 = vrot.lane.b32.xlu0 %v264, 1
          %v304 = vpop.permute.xlu0 %303
          %305 = vrot.lane.b32.xlu0 %v271, 1
          %v306 = vpop.permute.xlu0 %305
          %307 = vrot.lane.b32.xlu0 %v276, 1
          %v308 = vpop.permute.xlu0 %307
          %309 = vrot.lane.b32.xlu0 %v283, 1
          %v310 = vpop.permute.xlu0 %309
          %311 = vrot.lane.b32.xlu0 %v288, 1
          %v312 = vpop.permute.xlu0 %311
          %313 = vrot.lane.b32.xlu0 %v295, 1
          %v314 = vpop.permute.xlu0 %313
          %315 = vrot.lane.b32.xlu0 %v300, 1
          %v316 = vpop.permute.xlu0 %315
          %vm325 = vcmask 134152
          %vm326 = vsmask.f32 7938
          %vm327 = vmand %vm325, %vm326
          %v328 = vld [vmem:[#allocation2] sm:$0xf]
          %v329 = vsel %vm327, %v302, %v328
          %330 = vst [vmem:[#allocation2] sm:$0xf] %v329
          %vm331 = vcmask 131080
          %332 = vst.msk [vmem:[#allocation2 + $0x4] sm:$0x1] %vm331, %v304
          %v333 = vld [vmem:[#allocation2 + $0x8] sm:$0xf]
          %v334 = vsel %vm327, %v306, %v333
          %335 = vst [vmem:[#allocation2 + $0x8] sm:$0xf] %v334
          %336 = vst.msk [vmem:[#allocation2 + $0xc] sm:$0x1] %vm331, %v308
          %v337 = vld [vmem:[#allocation2 + $0x10] sm:$0xf]
          %v338 = vsel %vm327, %v310, %v337
          %339 = vst [vmem:[#allocation2 + $0x10] sm:$0xf] %v338
          %340 = vst.msk [vmem:[#allocation2 + $0x14] sm:$0x1] %vm331, %v312
          %v341 = vld [vmem:[#allocation2 + $0x18] sm:$0xf]
          %v342 = vsel %vm327, %v314, %v341
          %343 = vst [vmem:[#allocation2 + $0x18] sm:$0xf] %v342
          %344 = vst.msk [vmem:[#allocation2 + $0x1c] sm:$0x1] %vm331, %v316
        $region40: #{tpu_custom_call.1} parent=31 // pred_fallthru
          _
        %p345 = scmp.eq.s32.totalorder %s25, 1
        // Predicated region
        $region41: #{tpu_custom_call.1} parent=31 // pred_check
          %p346 = pneg %p345
        $region42: #{tpu_custom_call.1} parent=31 // pred_check_branch
          %348 = sbr.rel (%p346) target = $region44
        $region43: #{tpu_custom_call.1} parent=31 // pred_region
          %v349 = vld [vmem:[%s180 + $0x7] sm:$0xff]
          %v350 = vld [vmem:[%s180 + $0xf] sm:$0x1]
          %v351 = vld [vmem:[%s180 + $0x17] sm:$0xff]
          %v352 = vld [vmem:[%s180 + $0x1f] sm:$0x1]
          %v353 = vld [vmem:[%s180 + $0x27] sm:$0xff]
          %v354 = vld [vmem:[%s180 + $0x2f] sm:$0x1]
          %v355 = vld [vmem:[%s180 + $0x37] sm:$0xff]
          %v356 = vld [vmem:[%s180 + $0x3f] sm:$0x1]
          %v357 = vpack.c.bf16 %v350, %v349
          %v358 = vpack.c.bf16 %v352, %v351
          %v359 = vpack.c.bf16 %v354, %v353
          %v360 = vpack.c.bf16 %v356, %v355
          %v365 = vunpack.c.l.b16 %v357
          %v366 = vunpack.c.h.b16 %v357
          %v367 = vunpack.c.l.b16 %v358
          %v368 = vunpack.c.h.b16 %v358
          %v369 = vunpack.c.l.b16 %v359
          %v370 = vunpack.c.h.b16 %v359
          %v371 = vunpack.c.l.b16 %v360
          %v372 = vunpack.c.h.b16 %v360
          %v373 = vpack.c.b16 %v365, %v365
          %v374 = vpack.c.b16 %v366, %v366
          %v375 = vpack.c.b16 %v367, %v367
          %v376 = vpack.c.b16 %v368, %v368
          %v377 = vpack.c.b16 %v369, %v369
          %v378 = vpack.c.b16 %v370, %v370
          %v379 = vpack.c.b16 %v371, %v371
          %v380 = vpack.c.b16 %v372, %v372
          %381 = vrot.lane.b32.xlu0 %v373, 1
          %v382 = vpop.permute.xlu0 %381
          %383 = vrot.lane.b32.xlu0 %v374, 1
          %v384 = vpop.permute.xlu0 %383
          %385 = vrot.lane.b32.xlu0 %v375, 1
          %v386 = vpop.permute.xlu0 %385
          %387 = vrot.lane.b32.xlu0 %v376, 1
          %v388 = vpop.permute.xlu0 %387
          %389 = vrot.lane.b32.xlu0 %v377, 1
          %v390 = vpop.permute.xlu0 %389
          %391 = vrot.lane.b32.xlu0 %v378, 1
          %v392 = vpop.permute.xlu0 %391
          %393 = vrot.lane.b32.xlu0 %v379, 1
          %v394 = vpop.permute.xlu0 %393
          %395 = vrot.lane.b32.xlu0 %v380, 1
          %v396 = vpop.permute.xlu0 %395
          %vm405 = vcmask 134152
          %406 = vst.msk [vmem:[#allocation2] sm:$0xf] %vm405, %v382
          %vm407 = vcmask 131080
          %vm408 = vsmask.f32 256
          %vm409 = vmand %vm407, %vm408
          %v410 = vld [vmem:[#allocation2 + $0x4] sm:$0x1]
          %v411 = vsel %vm409, %v384, %v410
          %412 = vst [vmem:[#allocation2 + $0x4] sm:$0x1] %v411
          %413 = vst.msk [vmem:[#allocation2 + $0x8] sm:$0xf] %vm405, %v386
          %v414 = vld [vmem:[#allocation2 + $0xc] sm:$0x1]
          %v415 = vsel %vm409, %v388, %v414
          %416 = vst [vmem:[#allocation2 + $0xc] sm:$0x1] %v415
          %417 = vst.msk [vmem:[#allocation2 + $0x10] sm:$0xf] %vm405, %v390
          %v418 = vld [vmem:[#allocation2 + $0x14] sm:$0x1]
          %v419 = vsel %vm409, %v392, %v418
          %420 = vst [vmem:[#allocation2 + $0x14] sm:$0x1] %v419
          %421 = vst.msk [vmem:[#allocation2 + $0x18] sm:$0xf] %vm405, %v394
          %v422 = vld [vmem:[#allocation2 + $0x1c] sm:$0x1]
          %v423 = vsel %vm409, %v396, %v422
          %424 = vst [vmem:[#allocation2 + $0x1c] sm:$0x1] %v423
        $region44: #{tpu_custom_call.1} parent=31 // pred_fallthru
          _
        %p425 = scmp.gt.s32.totalorder %s25, 0
        %p426 = scmp.lt.s32.totalorder %s25, 1
        %p427 = pnand %p425, %p426
        %p428 = pneg %p427
        // Predicated region
        $region45: #{tpu_custom_call.1} parent=31 // pred_check
          _
        $region46: #{tpu_custom_call.1} parent=31 // pred_check_branch
          %430 = sbr.rel (%p427) target = $region48
        $region47: #{tpu_custom_call.1} parent=31 // pred_region
          %s431 = smul.u32 %s25, 8
          %s432 = ssub.s32 %s431, 1
          %s433 = scalar_lea.vmem %s180, %s432 [#allocation4]
          %v434 = vld [vmem:[%s433] sm:$0xff]
          %v435 = vld [vmem:[%s433 + $0x8] sm:$0x3]
          %v436 = vld [vmem:[%s433 + $0x10] sm:$0xff]
          %v437 = vld [vmem:[%s433 + $0x18] sm:$0x3]
          %v438 = vld [vmem:[%s433 + $0x20] sm:$0xff]
          %v439 = vld [vmem:[%s433 + $0x28] sm:$0x3]
          %v440 = vld [vmem:[%s433 + $0x30] sm:$0xff]
          %v441 = vld [vmem:[%s433 + $0x38] sm:$0x3]
          %v442 = vpack.c.bf16 %v435, %v434
          %v443 = vpack.c.bf16 %v437, %v436
          %v444 = vpack.c.bf16 %v439, %v438
          %v445 = vpack.c.bf16 %v441, %v440
          %v450 = vunpack.c.l.b16 %v442
          %v451 = vunpack.c.h.b16 %v442
          %v452 = vunpack.c.l.b16 %v443
          %v453 = vunpack.c.h.b16 %v443
          %v454 = vunpack.c.l.b16 %v444
          %v455 = vunpack.c.h.b16 %v444
          %v456 = vunpack.c.l.b16 %v445
          %v457 = vunpack.c.h.b16 %v445
          %v458 = vpack.c.b16 %v450, %v450
          %v459 = vpack.c.b16 %v451, %v451
          %v460 = vpack.c.b16 %v452, %v452
          %v461 = vpack.c.b16 %v453, %v453
          %v462 = vpack.c.b16 %v454, %v454
          %v463 = vpack.c.b16 %v455, %v455
          %v464 = vpack.c.b16 %v456, %v456
          %v465 = vpack.c.b16 %v457, %v457
          %466 = vrot.lane.b32.xlu0 %v458, 1
          %v467 = vpop.permute.xlu0 %466
          %468 = vrot.lane.b32.xlu0 %v459, 1
          %v469 = vpop.permute.xlu0 %468
          %470 = vrot.lane.b32.xlu0 %v460, 1
          %v471 = vpop.permute.xlu0 %470
          %472 = vrot.lane.b32.xlu0 %v461, 1
          %v473 = vpop.permute.xlu0 %472
          %474 = vrot.lane.b32.xlu0 %v462, 1
          %v475 = vpop.permute.xlu0 %474
          %476 = vrot.lane.b32.xlu0 %v463, 1
          %v477 = vpop.permute.xlu0 %476
          %478 = vrot.lane.b32.xlu0 %v464, 1
          %v479 = vpop.permute.xlu0 %478
          %480 = vrot.lane.b32.xlu0 %v465, 1
          %v481 = vpop.permute.xlu0 %480
          %vm490 = vcmask 134152
          %491 = vst.msk [vmem:[#allocation2] sm:$0xf] %vm490, %v467
          %vm492 = vcmask 131080
          %493 = vst.msk [vmem:[#allocation2 + $0x4] sm:$0x1] %vm492, %v469
          %494 = vst.msk [vmem:[#allocation2 + $0x8] sm:$0xf] %vm490, %v471
          %495 = vst.msk [vmem:[#allocation2 + $0xc] sm:$0x1] %vm492, %v473
          %496 = vst.msk [vmem:[#allocation2 + $0x10] sm:$0xf] %vm490, %v475
          %497 = vst.msk [vmem:[#allocation2 + $0x14] sm:$0x1] %vm492, %v477
          %498 = vst.msk [vmem:[#allocation2 + $0x18] sm:$0xf] %vm490, %v479
          %499 = vst.msk [vmem:[#allocation2 + $0x1c] sm:$0x1] %vm492, %v481
        $region48: #{tpu_custom_call.1} parent=31 // pred_fallthru
          _
        %v500 = vld [vmem:[#allocation2] sm:$0xf]
        %v501 = vld [vmem:[#allocation2 + $0x8] sm:$0xf]
        %v502 = vld [vmem:[#allocation2 + $0x10] sm:$0xf]
        %v503 = vld [vmem:[#allocation2 + $0x18] sm:$0xf]
        %v506 = vpack.i.b16 %v501, %v500
        %v507 = vshrl.u32 %v500, 16
        %v508 = vshrl.u32 %v501, 16
        %v509 = vpack.i.b16 %v508, %v507
        %v512 = vpack.i.b16 %v503, %v502
        %v513 = vshrl.u32 %v502, 16
        %v514 = vshrl.u32 %v503, 16
        %v515 = vpack.i.b16 %v514, %v513
        %v518 = vunpack.c.l.s4 1983009808
        %v519 = vunpack.c.0.s8 %v518
        %v520 = vlaneseq
        %v521 = vshrl.u32 %v520, 7
        %v522 = vsub.s32 %v519, %v521
        %v523 = vrot.slane %v506, %v522
        %v526 = vunpack.c.l.s4 1983009808
        %v527 = vunpack.c.0.s8 %v526
        %v528 = vlaneseq
        %v529 = vshrl.u32 %v528, 7
        %v530 = vsub.s32 %v527, %v529
        %v531 = vrot.slane %v512, %v530
        %v532 = vcombine.low %v523, %v531
        %v533 = vcombine.high %v523, %v531
        %v535 = vunpack.c.l.s4 1934713408
        %v536 = vunpack.c.0.s8 %v535
        %v537 = vlaneseq
        %v538 = vshrl.u32 %v537, 7
        %v539 = vsub.s32 %v536, %v538
        %v540 = vrot.slane %v532, %v539
        %v542 = vunpack.c.l.s4 1934713408
        %v543 = vunpack.c.0.s8 %v542
        %v544 = vlaneseq
        %v545 = vshrl.u32 %v544, 7
        %v546 = vsub.s32 %v543, %v545
        %v547 = vrot.slane %v533, %v546
        %v548 = vcombine.high %v540, 0
        %v549 = vcombine.high %v547, 0
        %v552 = vunpack.c.l.s4 1983009808
        %v553 = vunpack.c.0.s8 %v552
        %v554 = vlaneseq
        %v555 = vshrl.u32 %v554, 7
        %v556 = vsub.s32 %v553, %v555
        %v557 = vrot.slane %v509, %v556
        %v560 = vunpack.c.l.s4 1983009808
        %v561 = vunpack.c.0.s8 %v560
        %v562 = vlaneseq
        %v563 = vshrl.u32 %v562, 7
        %v564 = vsub.s32 %v561, %v563
        %v565 = vrot.slane %v515, %v564
        %v566 = vcombine.low %v557, %v565
        %v567 = vcombine.high %v557, %v565
        %v569 = vunpack.c.l.s4 1934713408
        %v570 = vunpack.c.0.s8 %v569
        %v571 = vlaneseq
        %v572 = vshrl.u32 %v571, 7
        %v573 = vsub.s32 %v570, %v572
        %v574 = vrot.slane %v566, %v573
        %v576 = vunpack.c.l.s4 1934713408
        %v577 = vunpack.c.0.s8 %v576
        %v578 = vlaneseq
        %v579 = vshrl.u32 %v578, 7
        %v580 = vsub.s32 %v577, %v579
        %v581 = vrot.slane %v567, %v580
        %v582 = vcombine.high %v574, 0
        %v583 = vcombine.high %v581, 0
        %v585 = vunpack.c.l.b16 %v574
        %v586 = vpack.c.b16 %v585, %v585
        %587 = vrot.lane.b32.xlu0 %v586, 16
        %v588 = vpop.permute.xlu0 %587
        %v590 = vunpack.c.l.b16 %v548
        %v591 = vpack.c.b16 %v590, %v590
        %592 = vrot.lane.b32.xlu0 %v591, 32
        %v593 = vpop.permute.xlu0 %592
        %v595 = vunpack.c.l.b16 %v582
        %v596 = vpack.c.b16 %v595, %v595
        %597 = vrot.lane.b32.xlu0 %v596, 48
        %v598 = vpop.permute.xlu0 %597
        %v600 = vunpack.c.l.b16 %v547
        %v601 = vpack.c.b16 %v600, %v600
        %602 = vrot.lane.b32.xlu0 %v601, 64
        %v603 = vpop.permute.xlu0 %602
        %v605 = vunpack.c.l.b16 %v581
        %v606 = vpack.c.b16 %v605, %v605
        %607 = vrot.lane.b32.xlu0 %v606, 80
        %v608 = vpop.permute.xlu0 %607
        %v610 = vunpack.c.l.b16 %v549
        %v611 = vpack.c.b16 %v610, %v610
        %612 = vrot.lane.b32.xlu0 %v611, 96
        %v613 = vpop.permute.xlu0 %612
        %v615 = vunpack.c.l.b16 %v583
        %v616 = vpack.c.b16 %v615, %v615
        %617 = vrot.lane.b32.xlu0 %v616, 112
        %v618 = vpop.permute.xlu0 %617
        %vm619 = vcmask 130048
        %v622 = vsel %vm619, %v540, %v588
        %vm623 = vcmask 261120
        %v625 = vsel %vm623, %v622, %v593
        %vm626 = vcmask 392192
        %v628 = vsel %vm626, %v625, %v598
        %vm629 = vcmask 523264
        %v631 = vsel %vm629, %v628, %v603
        %vm632 = vcmask 654336
        %v634 = vsel %vm632, %v631, %v608
        %vm635 = vcmask 785408
        %v637 = vsel %vm635, %v634, %v613
        %vm638 = vcmask 916480
        %v640 = vsel %vm638, %v637, %v618
        %642 = vst [vmem:[#allocation3] sm:$0x3] %v640
        %643 = vst [vmem:[#allocation3] sm:$0xc] 0
        %v644 = vld [vmem:[#allocation2] sm:$0xf]
        %v645 = vld [vmem:[#allocation2 + $0x8] sm:$0xf]
        %v646 = vld [vmem:[#allocation2 + $0x10] sm:$0xf]
        %v647 = vld [vmem:[#allocation2 + $0x18] sm:$0xf]
        %652 = vrot.lane.b32.xlu0 %v644, 127
        %v653 = vpop.permute.xlu0 %652
        %654 = vrot.lane.b32.xlu0 %v645, 127
        %v655 = vpop.permute.xlu0 %654
        %656 = vrot.lane.b32.xlu0 %v646, 127
        %v657 = vpop.permute.xlu0 %656
        %658 = vrot.lane.b32.xlu0 %v647, 127
        %v659 = vpop.permute.xlu0 %658
        %v662 = vpack.i.b16 %v655, %v653
        %v663 = vshrl.u32 %v653, 16
        %v664 = vshrl.u32 %v655, 16
        %v665 = vpack.i.b16 %v664, %v663
        %v668 = vpack.i.b16 %v659, %v657
        %v669 = vshrl.u32 %v657, 16
        %v670 = vshrl.u32 %v659, 16
        %v671 = vpack.i.b16 %v670, %v669
        %v674 = vunpack.c.l.s4 1983009808
        %v675 = vunpack.c.0.s8 %v674
        %v676 = vlaneseq
        %v677 = vshrl.u32 %v676, 7
        %v678 = vsub.s32 %v675, %v677
        %v679 = vrot.slane %v662, %v678
        %v682 = vunpack.c.l.s4 1983009808
        %v683 = vunpack.c.0.s8 %v682
        %v684 = vlaneseq
        %v685 = vshrl.u32 %v684, 7
        %v686 = vsub.s32 %v683, %v685
        %v687 = vrot.slane %v668, %v686
        %v688 = vcombine.low %v679, %v687
        %v689 = vcombine.high %v679, %v687
        %v691 = vunpack.c.l.s4 1934713408
        %v692 = vunpack.c.0.s8 %v691
        %v693 = vlaneseq
        %v694 = vshrl.u32 %v693, 7
        %v695 = vsub.s32 %v692, %v694
        %v696 = vrot.slane %v688, %v695
        %v698 = vunpack.c.l.s4 1934713408
        %v699 = vunpack.c.0.s8 %v698
        %v700 = vlaneseq
        %v701 = vshrl.u32 %v700, 7
        %v702 = vsub.s32 %v699, %v701
        %v703 = vrot.slane %v689, %v702
        %v704 = vcombine.high %v696, 0
        %v705 = vcombine.high %v703, 0
        %v708 = vunpack.c.l.s4 1983009808
        %v709 = vunpack.c.0.s8 %v708
        %v710 = vlaneseq
        %v711 = vshrl.u32 %v710, 7
        %v712 = vsub.s32 %v709, %v711
        %v713 = vrot.slane %v665, %v712
        %v716 = vunpack.c.l.s4 1983009808
        %v717 = vunpack.c.0.s8 %v716
        %v718 = vlaneseq
        %v719 = vshrl.u32 %v718, 7
        %v720 = vsub.s32 %v717, %v719
        %v721 = vrot.slane %v671, %v720
        %v722 = vcombine.low %v713, %v721
        %v723 = vcombine.high %v713, %v721
        %v725 = vunpack.c.l.s4 1934713408
        %v726 = vunpack.c.0.s8 %v725
        %v727 = vlaneseq
        %v728 = vshrl.u32 %v727, 7
        %v729 = vsub.s32 %v726, %v728
        %v730 = vrot.slane %v722, %v729
        %v732 = vunpack.c.l.s4 1934713408
        %v733 = vunpack.c.0.s8 %v732
        %v734 = vlaneseq
        %v735 = vshrl.u32 %v734, 7
        %v736 = vsub.s32 %v733, %v735
        %v737 = vrot.slane %v723, %v736
        %v738 = vcombine.high %v730, 0
        %v739 = vcombine.high %v737, 0
        %v741 = vunpack.c.l.b16 %v730
        %v742 = vpack.c.b16 %v741, %v741
        %743 = vrot.lane.b32.xlu0 %v742, 16
        %v744 = vpop.permute.xlu0 %743
        %v746 = vunpack.c.l.b16 %v704
        %v747 = vpack.c.b16 %v746, %v746
        %748 = vrot.lane.b32.xlu0 %v747, 32
        %v749 = vpop.permute.xlu0 %748
        %v751 = vunpack.c.l.b16 %v738
        %v752 = vpack.c.b16 %v751, %v751
        %753 = vrot.lane.b32.xlu0 %v752, 48
        %v754 = vpop.permute.xlu0 %753
        %v756 = vunpack.c.l.b16 %v703
        %v757 = vpack.c.b16 %v756, %v756
        %758 = vrot.lane.b32.xlu0 %v757, 64
        %v759 = vpop.permute.xlu0 %758
        %v761 = vunpack.c.l.b16 %v737
        %v762 = vpack.c.b16 %v761, %v761
        %763 = vrot.lane.b32.xlu0 %v762, 80
        %v764 = vpop.permute.xlu0 %763
        %v766 = vunpack.c.l.b16 %v705
        %v767 = vpack.c.b16 %v766, %v766
        %768 = vrot.lane.b32.xlu0 %v767, 96
        %v769 = vpop.permute.xlu0 %768
        %v771 = vunpack.c.l.b16 %v739
        %v772 = vpack.c.b16 %v771, %v771
        %773 = vrot.lane.b32.xlu0 %v772, 112
        %v774 = vpop.permute.xlu0 %773
        %v777 = vsel %vm619, %v696, %v744
        %v779 = vsel %vm623, %v777, %v749
        %v781 = vsel %vm626, %v779, %v754
        %v783 = vsel %vm629, %v781, %v759
        %v785 = vsel %vm632, %v783, %v764
        %v787 = vsel %vm635, %v785, %v769
        %v789 = vsel %vm638, %v787, %v774
        %791 = vst [vmem:[#allocation3 + $0x4] sm:$0x3] %v789
        %792 = vst [vmem:[#allocation3 + $0x4] sm:$0xc] 0
        %v793 = vld [vmem:[#allocation2] sm:$0xf]
        %v794 = vld [vmem:[#allocation2 + $0x8] sm:$0xf]
        %v795 = vld [vmem:[#allocation2 + $0x10] sm:$0xf]
        %v796 = vld [vmem:[#allocation2 + $0x18] sm:$0xf]
        %801 = vrot.lane.b32.xlu0 %v793, 126
        %v802 = vpop.permute.xlu0 %801
        %803 = vrot.lane.b32.xlu0 %v794, 126
        %v804 = vpop.permute.xlu0 %803
        %805 = vrot.lane.b32.xlu0 %v795, 126
        %v806 = vpop.permute.xlu0 %805
        %807 = vrot.lane.b32.xlu0 %v796, 126
        %v808 = vpop.permute.xlu0 %807
        %v811 = vpack.i.b16 %v804, %v802
        %v812 = vshrl.u32 %v802, 16
        %v813 = vshrl.u32 %v804, 16
        %v814 = vpack.i.b16 %v813, %v812
        %v817 = vpack.i.b16 %v808, %v806
        %v818 = vshrl.u32 %v806, 16
        %v819 = vshrl.u32 %v808, 16
        %v820 = vpack.i.b16 %v819, %v818
        %v823 = vunpack.c.l.s4 1983009808
        %v824 = vunpack.c.0.s8 %v823
        %v825 = vlaneseq
        %v826 = vshrl.u32 %v825, 7
        %v827 = vsub.s32 %v824, %v826
        %v828 = vrot.slane %v811, %v827
        %v831 = vunpack.c.l.s4 1983009808
        %v832 = vunpack.c.0.s8 %v831
        %v833 = vlaneseq
        %v834 = vshrl.u32 %v833, 7
        %v835 = vsub.s32 %v832, %v834
        %v836 = vrot.slane %v817, %v835
        %v837 = vcombine.low %v828, %v836
        %v838 = vcombine.high %v828, %v836
        %v840 = vunpack.c.l.s4 1934713408
        %v841 = vunpack.c.0.s8 %v840
        %v842 = vlaneseq
        %v843 = vshrl.u32 %v842, 7
        %v844 = vsub.s32 %v841, %v843
        %v845 = vrot.slane %v837, %v844
        %v847 = vunpack.c.l.s4 1934713408
        %v848 = vunpack.c.0.s8 %v847
        %v849 = vlaneseq
        %v850 = vshrl.u32 %v849, 7
        %v851 = vsub.s32 %v848, %v850
        %v852 = vrot.slane %v838, %v851
        %v853 = vcombine.high %v845, 0
        %v854 = vcombine.high %v852, 0
        %v857 = vunpack.c.l.s4 1983009808
        %v858 = vunpack.c.0.s8 %v857
        %v859 = vlaneseq
        %v860 = vshrl.u32 %v859, 7
        %v861 = vsub.s32 %v858, %v860
        %v862 = vrot.slane %v814, %v861
        %v865 = vunpack.c.l.s4 1983009808
        %v866 = vunpack.c.0.s8 %v865
        %v867 = vlaneseq
        %v868 = vshrl.u32 %v867, 7
        %v869 = vsub.s32 %v866, %v868
        %v870 = vrot.slane %v820, %v869
        %v871 = vcombine.low %v862, %v870
        %v872 = vcombine.high %v862, %v870
        %v874 = vunpack.c.l.s4 1934713408
        %v875 = vunpack.c.0.s8 %v874
        %v876 = vlaneseq
        %v877 = vshrl.u32 %v876, 7
        %v878 = vsub.s32 %v875, %v877
        %v879 = vrot.slane %v871, %v878
        %v881 = vunpack.c.l.s4 1934713408
        %v882 = vunpack.c.0.s8 %v881
        %v883 = vlaneseq
        %v884 = vshrl.u32 %v883, 7
        %v885 = vsub.s32 %v882, %v884
        %v886 = vrot.slane %v872, %v885
        %v887 = vcombine.high %v879, 0
        %v888 = vcombine.high %v886, 0
        %v890 = vunpack.c.l.b16 %v879
        %v891 = vpack.c.b16 %v890, %v890
        %892 = vrot.lane.b32.xlu0 %v891, 16
        %v893 = vpop.permute.xlu0 %892
        %v895 = vunpack.c.l.b16 %v853
        %v896 = vpack.c.b16 %v895, %v895
        %897 = vrot.lane.b32.xlu0 %v896, 32
        %v898 = vpop.permute.xlu0 %897
        %v900 = vunpack.c.l.b16 %v887
        %v901 = vpack.c.b16 %v900, %v900
        %902 = vrot.lane.b32.xlu0 %v901, 48
        %v903 = vpop.permute.xlu0 %902
        %v905 = vunpack.c.l.b16 %v852
        %v906 = vpack.c.b16 %v905, %v905
        %907 = vrot.lane.b32.xlu0 %v906, 64
        %v908 = vpop.permute.xlu0 %907
        %v910 = vunpack.c.l.b16 %v886
        %v911 = vpack.c.b16 %v910, %v910
        %912 = vrot.lane.b32.xlu0 %v911, 80
        %v913 = vpop.permute.xlu0 %912
        %v915 = vunpack.c.l.b16 %v854
        %v916 = vpack.c.b16 %v915, %v915
        %917 = vrot.lane.b32.xlu0 %v916, 96
        %v918 = vpop.permute.xlu0 %917
        %v920 = vunpack.c.l.b16 %v888
        %v921 = vpack.c.b16 %v920, %v920
        %922 = vrot.lane.b32.xlu0 %v921, 112
        %v923 = vpop.permute.xlu0 %922
        %v926 = vsel %vm619, %v845, %v893
        %v928 = vsel %vm623, %v926, %v898
        %v930 = vsel %vm626, %v928, %v903
        %v932 = vsel %vm629, %v930, %v908
        %v934 = vsel %vm632, %v932, %v913
        %v936 = vsel %vm635, %v934, %v918
        %v938 = vsel %vm638, %v936, %v923
        %940 = vst [vmem:[#allocation3 + $0x8] sm:$0x3] %v938
        %941 = vst [vmem:[#allocation3 + $0x8] sm:$0xc] 0
        %v942 = vld [vmem:[#allocation2] sm:$0xf]
        %v943 = vld [vmem:[#allocation2 + $0x4] sm:$0x1]
        %v944 = vld [vmem:[#allocation2 + $0x8] sm:$0xf]
        %v945 = vld [vmem:[#allocation2 + $0xc] sm:$0x1]
        %v946 = vld [vmem:[#allocation2 + $0x10] sm:$0xf]
        %v947 = vld [vmem:[#allocation2 + $0x14] sm:$0x1]
        %v948 = vld [vmem:[#allocation2 + $0x18] sm:$0xf]
        %v949 = vld [vmem:[#allocation2 + $0x1c] sm:$0x1]
        %vm950 = vsmask.f32 3328
        %vm951 = vsmask.f32 7440
        %vm952 = vmor %vm950, %vm951
        %v954 = vshrl.u32 %v942, 16
        %v956 = vrot.slane %v954, 4
        %v957 = vshll.u32 %v942, 16
        %v959 = vrot.slane %v957, 5
        %v960 = vor.u32 %v956, %v959
        %v961 = vrot.slane %v960, 4
        %v963 = vshll.u32 %v943, 16
        %v965 = vrot.slane %v963, 5
        %v966 = vsel %vm952, %v961, %v965
        %v968 = vshrl.u32 %v944, 16
        %v970 = vrot.slane %v968, 4
        %v971 = vshll.u32 %v944, 16
        %v973 = vrot.slane %v971, 5
        %v974 = vor.u32 %v970, %v973
        %v975 = vrot.slane %v974, 4
        %v977 = vshll.u32 %v945, 16
        %v979 = vrot.slane %v977, 5
        %v980 = vsel %vm952, %v975, %v979
        %v982 = vshrl.u32 %v946, 16
        %v984 = vrot.slane %v982, 4
        %v985 = vshll.u32 %v946, 16
        %v987 = vrot.slane %v985, 5
        %v988 = vor.u32 %v984, %v987
        %v989 = vrot.slane %v988, 4
        %v991 = vshll.u32 %v947, 16
        %v993 = vrot.slane %v991, 5
        %v994 = vsel %vm952, %v989, %v993
        %v996 = vshrl.u32 %v948, 16
        %v998 = vrot.slane %v996, 4
        %v999 = vshll.u32 %v948, 16
        %v1001 = vrot.slane %v999, 5
        %v1002 = vor.u32 %v998, %v1001
        %v1003 = vrot.slane %v1002, 4
        %v1005 = vshll.u32 %v949, 16
        %v1007 = vrot.slane %v1005, 5
        %v1008 = vsel %vm952, %v1003, %v1007
        %v1011 = vpack.i.b16 %v980, %v966
        %v1012 = vshrl.u32 %v966, 16
        %v1013 = vshrl.u32 %v980, 16
        %v1014 = vpack.i.b16 %v1013, %v1012
        %v1017 = vpack.i.b16 %v1008, %v994
        %v1018 = vshrl.u32 %v994, 16
        %v1019 = vshrl.u32 %v1008, 16
        %v1020 = vpack.i.b16 %v1019, %v1018
        %v1023 = vunpack.c.l.s4 1983009808
        %v1024 = vunpack.c.0.s8 %v1023
        %v1025 = vlaneseq
        %v1026 = vshrl.u32 %v1025, 7
        %v1027 = vsub.s32 %v1024, %v1026
        %v1028 = vrot.slane %v1011, %v1027
        %v1031 = vunpack.c.l.s4 1983009808
        %v1032 = vunpack.c.0.s8 %v1031
        %v1033 = vlaneseq
        %v1034 = vshrl.u32 %v1033, 7
        %v1035 = vsub.s32 %v1032, %v1034
        %v1036 = vrot.slane %v1017, %v1035
        %v1037 = vcombine.low %v1028, %v1036
        %v1038 = vcombine.high %v1028, %v1036
        %v1040 = vunpack.c.l.s4 1934713408
        %v1041 = vunpack.c.0.s8 %v1040
        %v1042 = vlaneseq
        %v1043 = vshrl.u32 %v1042, 7
        %v1044 = vsub.s32 %v1041, %v1043
        %v1045 = vrot.slane %v1037, %v1044
        %v1047 = vunpack.c.l.s4 1934713408
        %v1048 = vunpack.c.0.s8 %v1047
        %v1049 = vlaneseq
        %v1050 = vshrl.u32 %v1049, 7
        %v1051 = vsub.s32 %v1048, %v1050
        %v1052 = vrot.slane %v1038, %v1051
        %v1053 = vcombine.high %v1045, 0
        %v1054 = vcombine.high %v1052, 0
        %v1057 = vunpack.c.l.s4 1983009808
        %v1058 = vunpack.c.0.s8 %v1057
        %v1059 = vlaneseq
        %v1060 = vshrl.u32 %v1059, 7
        %v1061 = vsub.s32 %v1058, %v1060
        %v1062 = vrot.slane %v1014, %v1061
        %v1065 = vunpack.c.l.s4 1983009808
        %v1066 = vunpack.c.0.s8 %v1065
        %v1067 = vlaneseq
        %v1068 = vshrl.u32 %v1067, 7
        %v1069 = vsub.s32 %v1066, %v1068
        %v1070 = vrot.slane %v1020, %v1069
        %v1071 = vcombine.low %v1062, %v1070
        %v1072 = vcombine.high %v1062, %v1070
        %v1074 = vunpack.c.l.s4 1934713408
        %v1075 = vunpack.c.0.s8 %v1074
        %v1076 = vlaneseq
        %v1077 = vshrl.u32 %v1076, 7
        %v1078 = vsub.s32 %v1075, %v1077
        %v1079 = vrot.slane %v1071, %v1078
        %v1081 = vunpack.c.l.s4 1934713408
        %v1082 = vunpack.c.0.s8 %v1081
        %v1083 = vlaneseq
        %v1084 = vshrl.u32 %v1083, 7
        %v1085 = vsub.s32 %v1082, %v1084
        %v1086 = vrot.slane %v1072, %v1085
        %v1087 = vcombine.high %v1079, 0
        %v1088 = vcombine.high %v1086, 0
        %v1090 = vunpack.c.l.b16 %v1079
        %v1091 = vpack.c.b16 %v1090, %v1090
        %1092 = vrot.lane.b32.xlu0 %v1091, 16
        %v1093 = vpop.permute.xlu0 %1092
        %v1095 = vunpack.c.l.b16 %v1053
        %v1096 = vpack.c.b16 %v1095, %v1095
        %1097 = vrot.lane.b32.xlu0 %v1096, 32
        %v1098 = vpop.permute.xlu0 %1097
        %v1100 = vunpack.c.l.b16 %v1087
        %v1101 = vpack.c.b16 %v1100, %v1100
        %1102 = vrot.lane.b32.xlu0 %v1101, 48
        %v1103 = vpop.permute.xlu0 %1102
        %v1105 = vunpack.c.l.b16 %v1052
        %v1106 = vpack.c.b16 %v1105, %v1105
        %1107 = vrot.lane.b32.xlu0 %v1106, 64
        %v1108 = vpop.permute.xlu0 %1107
        %v1110 = vunpack.c.l.b16 %v1086
        %v1111 = vpack.c.b16 %v1110, %v1110
        %1112 = vrot.lane.b32.xlu0 %v1111, 80
        %v1113 = vpop.permute.xlu0 %1112
        %v1115 = vunpack.c.l.b16 %v1054
        %v1116 = vpack.c.b16 %v1115, %v1115
        %1117 = vrot.lane.b32.xlu0 %v1116, 96
        %v1118 = vpop.permute.xlu0 %1117
        %v1120 = vunpack.c.l.b16 %v1088
        %v1121 = vpack.c.b16 %v1120, %v1120
        %1122 = vrot.lane.b32.xlu0 %v1121, 112
        %v1123 = vpop.permute.xlu0 %1122
        %v1126 = vsel %vm619, %v1045, %v1093
        %v1128 = vsel %vm623, %v1126, %v1098
        %v1130 = vsel %vm626, %v1128, %v1103
        %v1132 = vsel %vm629, %v1130, %v1108
        %v1134 = vsel %vm632, %v1132, %v1113
        %v1136 = vsel %vm635, %v1134, %v1118
        %v1138 = vsel %vm638, %v1136, %v1123
        %1140 = vst [vmem:[#allocation3 + $0xc] sm:$0x3] %v1138
        %1141 = vst [vmem:[#allocation3 + $0xc] sm:$0xc] 0
        %v1142 = vld [vmem:[#allocation2] sm:$0xf]
        %v1143 = vld [vmem:[#allocation2 + $0x4] sm:$0x1]
        %v1144 = vld [vmem:[#allocation2 + $0x8] sm:$0xf]
        %v1145 = vld [vmem:[#allocation2 + $0xc] sm:$0x1]
        %v1146 = vld [vmem:[#allocation2 + $0x10] sm:$0xf]
        %v1147 = vld [vmem:[#allocation2 + $0x14] sm:$0x1]
        %v1148 = vld [vmem:[#allocation2 + $0x18] sm:$0xf]
        %v1149 = vld [vmem:[#allocation2 + $0x1c] sm:$0x1]
        %v1151 = vshrl.u32 %v1142, 16
        %v1153 = vrot.slane %v1151, 4
        %v1154 = vshll.u32 %v1142, 16
        %v1156 = vrot.slane %v1154, 5
        %v1157 = vor.u32 %v1153, %v1156
        %v1158 = vrot.slane %v1157, 4
        %v1160 = vshll.u32 %v1143, 16
        %v1162 = vrot.slane %v1160, 5
        %v1163 = vsel %vm952, %v1158, %v1162
        %v1165 = vshrl.u32 %v1144, 16
        %v1167 = vrot.slane %v1165, 4
        %v1168 = vshll.u32 %v1144, 16
        %v1170 = vrot.slane %v1168, 5
        %v1171 = vor.u32 %v1167, %v1170
        %v1172 = vrot.slane %v1171, 4
        %v1174 = vshll.u32 %v1145, 16
        %v1176 = vrot.slane %v1174, 5
        %v1177 = vsel %vm952, %v1172, %v1176
        %v1179 = vshrl.u32 %v1146, 16
        %v1181 = vrot.slane %v1179, 4
        %v1182 = vshll.u32 %v1146, 16
        %v1184 = vrot.slane %v1182, 5
        %v1185 = vor.u32 %v1181, %v1184
        %v1186 = vrot.slane %v1185, 4
        %v1188 = vshll.u32 %v1147, 16
        %v1190 = vrot.slane %v1188, 5
        %v1191 = vsel %vm952, %v1186, %v1190
        %v1193 = vshrl.u32 %v1148, 16
        %v1195 = vrot.slane %v1193, 4
        %v1196 = vshll.u32 %v1148, 16
        %v1198 = vrot.slane %v1196, 5
        %v1199 = vor.u32 %v1195, %v1198
        %v1200 = vrot.slane %v1199, 4
        %v1202 = vshll.u32 %v1149, 16
        %v1204 = vrot.slane %v1202, 5
        %v1205 = vsel %vm952, %v1200, %v1204
        %1206 = vrot.lane.b32.xlu0 %v1163, 127
        %v1207 = vpop.permute.xlu0 %1206
        %1208 = vrot.lane.b32.xlu0 %v1177, 127
        %v1209 = vpop.permute.xlu0 %1208
        %1210 = vrot.lane.b32.xlu0 %v1191, 127
        %v1211 = vpop.permute.xlu0 %1210
        %1212 = vrot.lane.b32.xlu0 %v1205, 127
        %v1213 = vpop.permute.xlu0 %1212
        %v1216 = vpack.i.b16 %v1209, %v1207
        %v1217 = vshrl.u32 %v1207, 16
        %v1218 = vshrl.u32 %v1209, 16
        %v1219 = vpack.i.b16 %v1218, %v1217
        %v1222 = vpack.i.b16 %v1213, %v1211
        %v1223 = vshrl.u32 %v1211, 16
        %v1224 = vshrl.u32 %v1213, 16
        %v1225 = vpack.i.b16 %v1224, %v1223
        %v1228 = vunpack.c.l.s4 1983009808
        %v1229 = vunpack.c.0.s8 %v1228
        %v1230 = vlaneseq
        %v1231 = vshrl.u32 %v1230, 7
        %v1232 = vsub.s32 %v1229, %v1231
        %v1233 = vrot.slane %v1216, %v1232
        %v1236 = vunpack.c.l.s4 1983009808
        %v1237 = vunpack.c.0.s8 %v1236
        %v1238 = vlaneseq
        %v1239 = vshrl.u32 %v1238, 7
        %v1240 = vsub.s32 %v1237, %v1239
        %v1241 = vrot.slane %v1222, %v1240
        %v1242 = vcombine.low %v1233, %v1241
        %v1243 = vcombine.high %v1233, %v1241
        %v1245 = vunpack.c.l.s4 1934713408
        %v1246 = vunpack.c.0.s8 %v1245
        %v1247 = vlaneseq
        %v1248 = vshrl.u32 %v1247, 7
        %v1249 = vsub.s32 %v1246, %v1248
        %v1250 = vrot.slane %v1242, %v1249
        %v1252 = vunpack.c.l.s4 1934713408
        %v1253 = vunpack.c.0.s8 %v1252
        %v1254 = vlaneseq
        %v1255 = vshrl.u32 %v1254, 7
        %v1256 = vsub.s32 %v1253, %v1255
        %v1257 = vrot.slane %v1243, %v1256
        %v1258 = vcombine.high %v1250, 0
        %v1259 = vcombine.high %v1257, 0
        %v1262 = vunpack.c.l.s4 1983009808
        %v1263 = vunpack.c.0.s8 %v1262
        %v1264 = vlaneseq
        %v1265 = vshrl.u32 %v1264, 7
        %v1266 = vsub.s32 %v1263, %v1265
        %v1267 = vrot.slane %v1219, %v1266
        %v1270 = vunpack.c.l.s4 1983009808
        %v1271 = vunpack.c.0.s8 %v1270
        %v1272 = vlaneseq
        %v1273 = vshrl.u32 %v1272, 7
        %v1274 = vsub.s32 %v1271, %v1273
        %v1275 = vrot.slane %v1225, %v1274
        %v1276 = vcombine.low %v1267, %v1275
        %v1277 = vcombine.high %v1267, %v1275
        %v1279 = vunpack.c.l.s4 1934713408
        %v1280 = vunpack.c.0.s8 %v1279
        %v1281 = vlaneseq
        %v1282 = vshrl.u32 %v1281, 7
        %v1283 = vsub.s32 %v1280, %v1282
        %v1284 = vrot.slane %v1276, %v1283
        %v1286 = vunpack.c.l.s4 1934713408
        %v1287 = vunpack.c.0.s8 %v1286
        %v1288 = vlaneseq
        %v1289 = vshrl.u32 %v1288, 7
        %v1290 = vsub.s32 %v1287, %v1289
        %v1291 = vrot.slane %v1277, %v1290
        %v1292 = vcombine.high %v1284, 0
        %v1293 = vcombine.high %v1291, 0
        %v1295 = vunpack.c.l.b16 %v1284
        %v1296 = vpack.c.b16 %v1295, %v1295
        %1297 = vrot.lane.b32.xlu0 %v1296, 16
        %v1298 = vpop.permute.xlu0 %1297
        %v1300 = vunpack.c.l.b16 %v1258
        %v1301 = vpack.c.b16 %v1300, %v1300
        %1302 = vrot.lane.b32.xlu0 %v1301, 32
        %v1303 = vpop.permute.xlu0 %1302
        %v1305 = vunpack.c.l.b16 %v1292
        %v1306 = vpack.c.b16 %v1305, %v1305
        %1307 = vrot.lane.b32.xlu0 %v1306, 48
        %v1308 = vpop.permute.xlu0 %1307
        %v1310 = vunpack.c.l.b16 %v1257
        %v1311 = vpack.c.b16 %v1310, %v1310
        %1312 = vrot.lane.b32.xlu0 %v1311, 64
        %v1313 = vpop.permute.xlu0 %1312
        %v1315 = vunpack.c.l.b16 %v1291
        %v1316 = vpack.c.b16 %v1315, %v1315
        %1317 = vrot.lane.b32.xlu0 %v1316, 80
        %v1318 = vpop.permute.xlu0 %1317
        %v1320 = vunpack.c.l.b16 %v1259
        %v1321 = vpack.c.b16 %v1320, %v1320
        %1322 = vrot.lane.b32.xlu0 %v1321, 96
        %v1323 = vpop.permute.xlu0 %1322
        %v1325 = vunpack.c.l.b16 %v1293
        %v1326 = vpack.c.b16 %v1325, %v1325
        %1327 = vrot.lane.b32.xlu0 %v1326, 112
        %v1328 = vpop.permute.xlu0 %1327
        %v1331 = vsel %vm619, %v1250, %v1298
        %v1333 = vsel %vm623, %v1331, %v1303
        %v1335 = vsel %vm626, %v1333, %v1308
        %v1337 = vsel %vm629, %v1335, %v1313
        %v1339 = vsel %vm632, %v1337, %v1318
        %v1341 = vsel %vm635, %v1339, %v1323
        %v1343 = vsel %vm638, %v1341, %v1328
        %1345 = vst [vmem:[#allocation3 + $0x10] sm:$0x3] %v1343
        %1346 = vst [vmem:[#allocation3 + $0x10] sm:$0xc] 0
        %v1347 = vld [vmem:[#allocation2] sm:$0xf]
        %v1348 = vld [vmem:[#allocation2 + $0x4] sm:$0x1]
        %v1349 = vld [vmem:[#allocation2 + $0x8] sm:$0xf]
        %v1350 = vld [vmem:[#allocation2 + $0xc] sm:$0x1]
        %v1351 = vld [vmem:[#allocation2 + $0x10] sm:$0xf]
        %v1352 = vld [vmem:[#allocation2 + $0x14] sm:$0x1]
        %v1353 = vld [vmem:[#allocation2 + $0x18] sm:$0xf]
        %v1354 = vld [vmem:[#allocation2 + $0x1c] sm:$0x1]
        %v1356 = vshrl.u32 %v1347, 16
        %v1358 = vrot.slane %v1356, 4
        %v1359 = vshll.u32 %v1347, 16
        %v1361 = vrot.slane %v1359, 5
        %v1362 = vor.u32 %v1358, %v1361
        %v1363 = vrot.slane %v1362, 4
        %v1365 = vshll.u32 %v1348, 16
        %v1367 = vrot.slane %v1365, 5
        %v1368 = vsel %vm952, %v1363, %v1367
        %v1370 = vshrl.u32 %v1349, 16
        %v1372 = vrot.slane %v1370, 4
        %v1373 = vshll.u32 %v1349, 16
        %v1375 = vrot.slane %v1373, 5
        %v1376 = vor.u32 %v1372, %v1375
        %v1377 = vrot.slane %v1376, 4
        %v1379 = vshll.u32 %v1350, 16
        %v1381 = vrot.slane %v1379, 5
        %v1382 = vsel %vm952, %v1377, %v1381
        %v1384 = vshrl.u32 %v1351, 16
        %v1386 = vrot.slane %v1384, 4
        %v1387 = vshll.u32 %v1351, 16
        %v1389 = vrot.slane %v1387, 5
        %v1390 = vor.u32 %v1386, %v1389
        %v1391 = vrot.slane %v1390, 4
        %v1393 = vshll.u32 %v1352, 16
        %v1395 = vrot.slane %v1393, 5
        %v1396 = vsel %vm952, %v1391, %v1395
        %v1398 = vshrl.u32 %v1353, 16
        %v1400 = vrot.slane %v1398, 4
        %v1401 = vshll.u32 %v1353, 16
        %v1403 = vrot.slane %v1401, 5
        %v1404 = vor.u32 %v1400, %v1403
        %v1405 = vrot.slane %v1404, 4
        %v1407 = vshll.u32 %v1354, 16
        %v1409 = vrot.slane %v1407, 5
        %v1410 = vsel %vm952, %v1405, %v1409
        %1411 = vrot.lane.b32.xlu0 %v1368, 126
        %v1412 = vpop.permute.xlu0 %1411
        %1413 = vrot.lane.b32.xlu0 %v1382, 126
        %v1414 = vpop.permute.xlu0 %1413
        %1415 = vrot.lane.b32.xlu0 %v1396, 126
        %v1416 = vpop.permute.xlu0 %1415
        %1417 = vrot.lane.b32.xlu0 %v1410, 126
        %v1418 = vpop.permute.xlu0 %1417
        %v1421 = vpack.i.b16 %v1414, %v1412
        %v1422 = vshrl.u32 %v1412, 16
        %v1423 = vshrl.u32 %v1414, 16
        %v1424 = vpack.i.b16 %v1423, %v1422
        %v1427 = vpack.i.b16 %v1418, %v1416
        %v1428 = vshrl.u32 %v1416, 16
        %v1429 = vshrl.u32 %v1418, 16
        %v1430 = vpack.i.b16 %v1429, %v1428
        %v1433 = vunpack.c.l.s4 1983009808
        %v1434 = vunpack.c.0.s8 %v1433
        %v1435 = vlaneseq
        %v1436 = vshrl.u32 %v1435, 7
        %v1437 = vsub.s32 %v1434, %v1436
        %v1438 = vrot.slane %v1421, %v1437
        %v1441 = vunpack.c.l.s4 1983009808
        %v1442 = vunpack.c.0.s8 %v1441
        %v1443 = vlaneseq
        %v1444 = vshrl.u32 %v1443, 7
        %v1445 = vsub.s32 %v1442, %v1444
        %v1446 = vrot.slane %v1427, %v1445
        %v1447 = vcombine.low %v1438, %v1446
        %v1448 = vcombine.high %v1438, %v1446
        %v1450 = vunpack.c.l.s4 1934713408
        %v1451 = vunpack.c.0.s8 %v1450
        %v1452 = vlaneseq
        %v1453 = vshrl.u32 %v1452, 7
        %v1454 = vsub.s32 %v1451, %v1453
        %v1455 = vrot.slane %v1447, %v1454
        %v1457 = vunpack.c.l.s4 1934713408
        %v1458 = vunpack.c.0.s8 %v1457
        %v1459 = vlaneseq
        %v1460 = vshrl.u32 %v1459, 7
        %v1461 = vsub.s32 %v1458, %v1460
        %v1462 = vrot.slane %v1448, %v1461
        %v1463 = vcombine.high %v1455, 0
        %v1464 = vcombine.high %v1462, 0
        %v1467 = vunpack.c.l.s4 1983009808
        %v1468 = vunpack.c.0.s8 %v1467
        %v1469 = vlaneseq
        %v1470 = vshrl.u32 %v1469, 7
        %v1471 = vsub.s32 %v1468, %v1470
        %v1472 = vrot.slane %v1424, %v1471
        %v1475 = vunpack.c.l.s4 1983009808
        %v1476 = vunpack.c.0.s8 %v1475
        %v1477 = vlaneseq
        %v1478 = vshrl.u32 %v1477, 7
        %v1479 = vsub.s32 %v1476, %v1478
        %v1480 = vrot.slane %v1430, %v1479
        %v1481 = vcombine.low %v1472, %v1480
        %v1482 = vcombine.high %v1472, %v1480
        %v1484 = vunpack.c.l.s4 1934713408
        %v1485 = vunpack.c.0.s8 %v1484
        %v1486 = vlaneseq
        %v1487 = vshrl.u32 %v1486, 7
        %v1488 = vsub.s32 %v1485, %v1487
        %v1489 = vrot.slane %v1481, %v1488
        %v1491 = vunpack.c.l.s4 1934713408
        %v1492 = vunpack.c.0.s8 %v1491
        %v1493 = vlaneseq
        %v1494 = vshrl.u32 %v1493, 7
        %v1495 = vsub.s32 %v1492, %v1494
        %v1496 = vrot.slane %v1482, %v1495
        %v1497 = vcombine.high %v1489, 0
        %v1498 = vcombine.high %v1496, 0
        %v1500 = vunpack.c.l.b16 %v1489
        %v1501 = vpack.c.b16 %v1500, %v1500
        %1502 = vrot.lane.b32.xlu0 %v1501, 16
        %v1503 = vpop.permute.xlu0 %1502
        %v1505 = vunpack.c.l.b16 %v1463
        %v1506 = vpack.c.b16 %v1505, %v1505
        %1507 = vrot.lane.b32.xlu0 %v1506, 32
        %v1508 = vpop.permute.xlu0 %1507
        %v1510 = vunpack.c.l.b16 %v1497
        %v1511 = vpack.c.b16 %v1510, %v1510
        %1512 = vrot.lane.b32.xlu0 %v1511, 48
        %v1513 = vpop.permute.xlu0 %1512
        %v1515 = vunpack.c.l.b16 %v1462
        %v1516 = vpack.c.b16 %v1515, %v1515
        %1517 = vrot.lane.b32.xlu0 %v1516, 64
        %v1518 = vpop.permute.xlu0 %1517
        %v1520 = vunpack.c.l.b16 %v1496
        %v1521 = vpack.c.b16 %v1520, %v1520
        %1522 = vrot.lane.b32.xlu0 %v1521, 80
        %v1523 = vpop.permute.xlu0 %1522
        %v1525 = vunpack.c.l.b16 %v1464
        %v1526 = vpack.c.b16 %v1525, %v1525
        %1527 = vrot.lane.b32.xlu0 %v1526, 96
        %v1528 = vpop.permute.xlu0 %1527
        %v1530 = vunpack.c.l.b16 %v1498
        %v1531 = vpack.c.b16 %v1530, %v1530
        %1532 = vrot.lane.b32.xlu0 %v1531, 112
        %v1533 = vpop.permute.xlu0 %1532
        %v1536 = vsel %vm619, %v1455, %v1503
        %v1538 = vsel %vm623, %v1536, %v1508
        %v1540 = vsel %vm626, %v1538, %v1513
        %v1542 = vsel %vm629, %v1540, %v1518
        %v1544 = vsel %vm632, %v1542, %v1523
        %v1546 = vsel %vm635, %v1544, %v1528
        %v1548 = vsel %vm638, %v1546, %v1533
        %1550 = vst [vmem:[#allocation3 + $0x14] sm:$0x3] %v1548
        %1551 = vst [vmem:[#allocation3 + $0x14] sm:$0xc] 0
        %v1552 = vld [vmem:[#allocation2] sm:$0xe]
        %v1553 = vld [vmem:[#allocation2 + $0x4] sm:$0x1]
        %v1554 = vld [vmem:[#allocation2 + $0x8] sm:$0xe]
        %v1555 = vld [vmem:[#allocation2 + $0xc] sm:$0x1]
        %v1556 = vld [vmem:[#allocation2 + $0x10] sm:$0xe]
        %v1557 = vld [vmem:[#allocation2 + $0x14] sm:$0x1]
        %v1558 = vld [vmem:[#allocation2 + $0x18] sm:$0xe]
        %v1559 = vld [vmem:[#allocation2 + $0x1c] sm:$0x1]
        %vm1568 = vcmask 1042432
        %vm1569 = vcmask 1046532
        %vm1570 = vmor %vm1568, %vm1569
        %v1571 = vrot.slane %v1552, 5
        %v1572 = vrot.slane %v1571, 4
        %v1573 = vrot.slane %v1553, 5
        %v1574 = vsel %vm1570, %v1572, %v1573
        %v1575 = vrot.slane %v1554, 5
        %v1576 = vrot.slane %v1575, 4
        %v1577 = vrot.slane %v1555, 5
        %v1578 = vsel %vm1570, %v1576, %v1577
        %v1579 = vrot.slane %v1556, 5
        %v1580 = vrot.slane %v1579, 4
        %v1581 = vrot.slane %v1557, 5
        %v1582 = vsel %vm1570, %v1580, %v1581
        %v1583 = vrot.slane %v1558, 5
        %v1584 = vrot.slane %v1583, 4
        %v1585 = vrot.slane %v1559, 5
        %v1586 = vsel %vm1570, %v1584, %v1585
        %v1589 = vpack.i.b16 %v1578, %v1574
        %v1590 = vshrl.u32 %v1574, 16
        %v1591 = vshrl.u32 %v1578, 16
        %v1592 = vpack.i.b16 %v1591, %v1590
        %v1595 = vpack.i.b16 %v1586, %v1582
        %v1596 = vshrl.u32 %v1582, 16
        %v1597 = vshrl.u32 %v1586, 16
        %v1598 = vpack.i.b16 %v1597, %v1596
        %v1601 = vunpack.c.l.s4 1983009808
        %v1602 = vunpack.c.0.s8 %v1601
        %v1603 = vlaneseq
        %v1604 = vshrl.u32 %v1603, 7
        %v1605 = vsub.s32 %v1602, %v1604
        %v1606 = vrot.slane %v1589, %v1605
        %v1609 = vunpack.c.l.s4 1983009808
        %v1610 = vunpack.c.0.s8 %v1609
        %v1611 = vlaneseq
        %v1612 = vshrl.u32 %v1611, 7
        %v1613 = vsub.s32 %v1610, %v1612
        %v1614 = vrot.slane %v1595, %v1613
        %v1615 = vcombine.low %v1606, %v1614
        %v1616 = vcombine.high %v1606, %v1614
        %v1618 = vunpack.c.l.s4 1934713408
        %v1619 = vunpack.c.0.s8 %v1618
        %v1620 = vlaneseq
        %v1621 = vshrl.u32 %v1620, 7
        %v1622 = vsub.s32 %v1619, %v1621
        %v1623 = vrot.slane %v1615, %v1622
        %v1625 = vunpack.c.l.s4 1934713408
        %v1626 = vunpack.c.0.s8 %v1625
        %v1627 = vlaneseq
        %v1628 = vshrl.u32 %v1627, 7
        %v1629 = vsub.s32 %v1626, %v1628
        %v1630 = vrot.slane %v1616, %v1629
        %v1631 = vcombine.high %v1623, 0
        %v1632 = vcombine.high %v1630, 0
        %v1635 = vunpack.c.l.s4 1983009808
        %v1636 = vunpack.c.0.s8 %v1635
        %v1637 = vlaneseq
        %v1638 = vshrl.u32 %v1637, 7
        %v1639 = vsub.s32 %v1636, %v1638
        %v1640 = vrot.slane %v1592, %v1639
        %v1643 = vunpack.c.l.s4 1983009808
        %v1644 = vunpack.c.0.s8 %v1643
        %v1645 = vlaneseq
        %v1646 = vshrl.u32 %v1645, 7
        %v1647 = vsub.s32 %v1644, %v1646
        %v1648 = vrot.slane %v1598, %v1647
        %v1649 = vcombine.low %v1640, %v1648
        %v1650 = vcombine.high %v1640, %v1648
        %v1652 = vunpack.c.l.s4 1934713408
        %v1653 = vunpack.c.0.s8 %v1652
        %v1654 = vlaneseq
        %v1655 = vshrl.u32 %v1654, 7
        %v1656 = vsub.s32 %v1653, %v1655
        %v1657 = vrot.slane %v1649, %v1656
        %v1659 = vunpack.c.l.s4 1934713408
        %v1660 = vunpack.c.0.s8 %v1659
        %v1661 = vlaneseq
        %v1662 = vshrl.u32 %v1661, 7
        %v1663 = vsub.s32 %v1660, %v1662
        %v1664 = vrot.slane %v1650, %v1663
        %v1665 = vcombine.high %v1657, 0
        %v1666 = vcombine.high %v1664, 0
        %v1668 = vunpack.c.l.b16 %v1657
        %v1669 = vpack.c.b16 %v1668, %v1668
        %1670 = vrot.lane.b32.xlu0 %v1669, 16
        %v1671 = vpop.permute.xlu0 %1670
        %v1673 = vunpack.c.l.b16 %v1631
        %v1674 = vpack.c.b16 %v1673, %v1673
        %1675 = vrot.lane.b32.xlu0 %v1674, 32
        %v1676 = vpop.permute.xlu0 %1675
        %v1678 = vunpack.c.l.b16 %v1665
        %v1679 = vpack.c.b16 %v1678, %v1678
        %1680 = vrot.lane.b32.xlu0 %v1679, 48
        %v1681 = vpop.permute.xlu0 %1680
        %v1683 = vunpack.c.l.b16 %v1630
        %v1684 = vpack.c.b16 %v1683, %v1683
        %1685 = vrot.lane.b32.xlu0 %v1684, 64
        %v1686 = vpop.permute.xlu0 %1685
        %v1688 = vunpack.c.l.b16 %v1664
        %v1689 = vpack.c.b16 %v1688, %v1688
        %1690 = vrot.lane.b32.xlu0 %v1689, 80
        %v1691 = vpop.permute.xlu0 %1690
        %v1693 = vunpack.c.l.b16 %v1632
        %v1694 = vpack.c.b16 %v1693, %v1693
        %1695 = vrot.lane.b32.xlu0 %v1694, 96
        %v1696 = vpop.permute.xlu0 %1695
        %v1698 = vunpack.c.l.b16 %v1666
        %v1699 = vpack.c.b16 %v1698, %v1698
        %1700 = vrot.lane.b32.xlu0 %v1699, 112
        %v1701 = vpop.permute.xlu0 %1700
        %v1704 = vsel %vm619, %v1623, %v1671
        %v1706 = vsel %vm623, %v1704, %v1676
        %v1708 = vsel %vm626, %v1706, %v1681
        %v1710 = vsel %vm629, %v1708, %v1686
        %v1712 = vsel %vm632, %v1710, %v1691
        %v1714 = vsel %vm635, %v1712, %v1696
        %v1716 = vsel %vm638, %v1714, %v1701
        %1718 = vst [vmem:[#allocation3 + $0x18] sm:$0x3] %v1716
        %1719 = vst [vmem:[#allocation3 + $0x18] sm:$0xc] 0
        %v1720 = vld [vmem:[#allocation2] sm:$0xe]
        %v1721 = vld [vmem:[#allocation2 + $0x4] sm:$0x1]
        %v1722 = vld [vmem:[#allocation2 + $0x8] sm:$0xe]
        %v1723 = vld [vmem:[#allocation2 + $0xc] sm:$0x1]
        %v1724 = vld [vmem:[#allocation2 + $0x10] sm:$0xe]
        %v1725 = vld [vmem:[#allocation2 + $0x14] sm:$0x1]
        %v1726 = vld [vmem:[#allocation2 + $0x18] sm:$0xe]
        %v1727 = vld [vmem:[#allocation2 + $0x1c] sm:$0x1]
        %v1736 = vrot.slane %v1720, 5
        %v1737 = vrot.slane %v1736, 4
        %v1738 = vrot.slane %v1721, 5
        %v1739 = vsel %vm1570, %v1737, %v1738
        %v1740 = vrot.slane %v1722, 5
        %v1741 = vrot.slane %v1740, 4
        %v1742 = vrot.slane %v1723, 5
        %v1743 = vsel %vm1570, %v1741, %v1742
        %v1744 = vrot.slane %v1724, 5
        %v1745 = vrot.slane %v1744, 4
        %v1746 = vrot.slane %v1725, 5
        %v1747 = vsel %vm1570, %v1745, %v1746
        %v1748 = vrot.slane %v1726, 5
        %v1749 = vrot.slane %v1748, 4
        %v1750 = vrot.slane %v1727, 5
        %v1751 = vsel %vm1570, %v1749, %v1750
        %1752 = vrot.lane.b32.xlu0 %v1739, 127
        %v1753 = vpop.permute.xlu0 %1752
        %1754 = vrot.lane.b32.xlu0 %v1743, 127
        %v1755 = vpop.permute.xlu0 %1754
        %1756 = vrot.lane.b32.xlu0 %v1747, 127
        %v1757 = vpop.permute.xlu0 %1756
        %1758 = vrot.lane.b32.xlu0 %v1751, 127
        %v1759 = vpop.permute.xlu0 %1758
        %v1762 = vpack.i.b16 %v1755, %v1753
        %v1763 = vshrl.u32 %v1753, 16
        %v1764 = vshrl.u32 %v1755, 16
        %v1765 = vpack.i.b16 %v1764, %v1763
        %v1768 = vpack.i.b16 %v1759, %v1757
        %v1769 = vshrl.u32 %v1757, 16
        %v1770 = vshrl.u32 %v1759, 16
        %v1771 = vpack.i.b16 %v1770, %v1769
        %v1774 = vunpack.c.l.s4 1983009808
        %v1775 = vunpack.c.0.s8 %v1774
        %v1776 = vlaneseq
        %v1777 = vshrl.u32 %v1776, 7
        %v1778 = vsub.s32 %v1775, %v1777
        %v1779 = vrot.slane %v1762, %v1778
        %v1782 = vunpack.c.l.s4 1983009808
        %v1783 = vunpack.c.0.s8 %v1782
        %v1784 = vlaneseq
        %v1785 = vshrl.u32 %v1784, 7
        %v1786 = vsub.s32 %v1783, %v1785
        %v1787 = vrot.slane %v1768, %v1786
        %v1788 = vcombine.low %v1779, %v1787
        %v1789 = vcombine.high %v1779, %v1787
        %v1791 = vunpack.c.l.s4 1934713408
        %v1792 = vunpack.c.0.s8 %v1791
        %v1793 = vlaneseq
        %v1794 = vshrl.u32 %v1793, 7
        %v1795 = vsub.s32 %v1792, %v1794
        %v1796 = vrot.slane %v1788, %v1795
        %v1798 = vunpack.c.l.s4 1934713408
        %v1799 = vunpack.c.0.s8 %v1798
        %v1800 = vlaneseq
        %v1801 = vshrl.u32 %v1800, 7
        %v1802 = vsub.s32 %v1799, %v1801
        %v1803 = vrot.slane %v1789, %v1802
        %v1804 = vcombine.high %v1796, 0
        %v1805 = vcombine.high %v1803, 0
        %v1808 = vunpack.c.l.s4 1983009808
        %v1809 = vunpack.c.0.s8 %v1808
        %v1810 = vlaneseq
        %v1811 = vshrl.u32 %v1810, 7
        %v1812 = vsub.s32 %v1809, %v1811
        %v1813 = vrot.slane %v1765, %v1812
        %v1816 = vunpack.c.l.s4 1983009808
        %v1817 = vunpack.c.0.s8 %v1816
        %v1818 = vlaneseq
        %v1819 = vshrl.u32 %v1818, 7
        %v1820 = vsub.s32 %v1817, %v1819
        %v1821 = vrot.slane %v1771, %v1820
        %v1822 = vcombine.low %v1813, %v1821
        %v1823 = vcombine.high %v1813, %v1821
        %v1825 = vunpack.c.l.s4 1934713408
        %v1826 = vunpack.c.0.s8 %v1825
        %v1827 = vlaneseq
        %v1828 = vshrl.u32 %v1827, 7
        %v1829 = vsub.s32 %v1826, %v1828
        %v1830 = vrot.slane %v1822, %v1829
        %v1832 = vunpack.c.l.s4 1934713408
        %v1833 = vunpack.c.0.s8 %v1832
        %v1834 = vlaneseq
        %v1835 = vshrl.u32 %v1834, 7
        %v1836 = vsub.s32 %v1833, %v1835
        %v1837 = vrot.slane %v1823, %v1836
        %v1838 = vcombine.high %v1830, 0
        %v1839 = vcombine.high %v1837, 0
        %v1841 = vunpack.c.l.b16 %v1830
        %v1842 = vpack.c.b16 %v1841, %v1841
        %1843 = vrot.lane.b32.xlu0 %v1842, 16
        %v1844 = vpop.permute.xlu0 %1843
        %v1846 = vunpack.c.l.b16 %v1804
        %v1847 = vpack.c.b16 %v1846, %v1846
        %1848 = vrot.lane.b32.xlu0 %v1847, 32
        %v1849 = vpop.permute.xlu0 %1848
        %v1851 = vunpack.c.l.b16 %v1838
        %v1852 = vpack.c.b16 %v1851, %v1851
        %1853 = vrot.lane.b32.xlu0 %v1852, 48
        %v1854 = vpop.permute.xlu0 %1853
        %v1856 = vunpack.c.l.b16 %v1803
        %v1857 = vpack.c.b16 %v1856, %v1856
        %1858 = vrot.lane.b32.xlu0 %v1857, 64
        %v1859 = vpop.permute.xlu0 %1858
        %v1861 = vunpack.c.l.b16 %v1837
        %v1862 = vpack.c.b16 %v1861, %v1861
        %1863 = vrot.lane.b32.xlu0 %v1862, 80
        %v1864 = vpop.permute.xlu0 %1863
        %v1866 = vunpack.c.l.b16 %v1805
        %v1867 = vpack.c.b16 %v1866, %v1866
        %1868 = vrot.lane.b32.xlu0 %v1867, 96
        %v1869 = vpop.permute.xlu0 %1868
        %v1871 = vunpack.c.l.b16 %v1839
        %v1872 = vpack.c.b16 %v1871, %v1871
        %1873 = vrot.lane.b32.xlu0 %v1872, 112
        %v1874 = vpop.permute.xlu0 %1873
        %v1877 = vsel %vm619, %v1796, %v1844
        %v1879 = vsel %vm623, %v1877, %v1849
        %v1881 = vsel %vm626, %v1879, %v1854
        %v1883 = vsel %vm629, %v1881, %v1859
        %v1885 = vsel %vm632, %v1883, %v1864
        %v1887 = vsel %vm635, %v1885, %v1869
        %v1889 = vsel %vm638, %v1887, %v1874
        %1891 = vst [vmem:[#allocation3 + $0x1c] sm:$0x3] %v1889
        %1892 = vst [vmem:[#allocation3 + $0x1c] sm:$0xc] 0
        %v1893 = vld [vmem:[#allocation2] sm:$0xe]
        %v1894 = vld [vmem:[#allocation2 + $0x4] sm:$0x1]
        %v1895 = vld [vmem:[#allocation2 + $0x8] sm:$0xe]
        %v1896 = vld [vmem:[#allocation2 + $0xc] sm:$0x1]
        %v1897 = vld [vmem:[#allocation2 + $0x10] sm:$0xe]
        %v1898 = vld [vmem:[#allocation2 + $0x14] sm:$0x1]
        %v1899 = vld [vmem:[#allocation2 + $0x18] sm:$0xe]
        %v1900 = vld [vmem:[#allocation2 + $0x1c] sm:$0x1]
        %v1909 = vrot.slane %v1893, 5
        %v1910 = vrot.slane %v1909, 4
        %v1911 = vrot.slane %v1894, 5
        %v1912 = vsel %vm1570, %v1910, %v1911
        %v1913 = vrot.slane %v1895, 5
        %v1914 = vrot.slane %v1913, 4
        %v1915 = vrot.slane %v1896, 5
        %v1916 = vsel %vm1570, %v1914, %v1915
        %v1917 = vrot.slane %v1897, 5
        %v1918 = vrot.slane %v1917, 4
        %v1919 = vrot.slane %v1898, 5
        %v1920 = vsel %vm1570, %v1918, %v1919
        %v1921 = vrot.slane %v1899, 5
        %v1922 = vrot.slane %v1921, 4
        %v1923 = vrot.slane %v1900, 5
        %v1924 = vsel %vm1570, %v1922, %v1923
        %1925 = vrot.lane.b32.xlu0 %v1912, 126
        %v1926 = vpop.permute.xlu0 %1925
        %1927 = vrot.lane.b32.xlu0 %v1916, 126
        %v1928 = vpop.permute.xlu0 %1927
        %1929 = vrot.lane.b32.xlu0 %v1920, 126
        %v1930 = vpop.permute.xlu0 %1929
        %1931 = vrot.lane.b32.xlu0 %v1924, 126
        %v1932 = vpop.permute.xlu0 %1931
        %v1935 = vpack.i.b16 %v1928, %v1926
        %v1936 = vshrl.u32 %v1926, 16
        %v1937 = vshrl.u32 %v1928, 16
        %v1938 = vpack.i.b16 %v1937, %v1936
        %v1941 = vpack.i.b16 %v1932, %v1930
        %v1942 = vshrl.u32 %v1930, 16
        %v1943 = vshrl.u32 %v1932, 16
        %v1944 = vpack.i.b16 %v1943, %v1942
        %v1947 = vunpack.c.l.s4 1983009808
        %v1948 = vunpack.c.0.s8 %v1947
        %v1949 = vlaneseq
        %v1950 = vshrl.u32 %v1949, 7
        %v1951 = vsub.s32 %v1948, %v1950
        %v1952 = vrot.slane %v1935, %v1951
        %v1955 = vunpack.c.l.s4 1983009808
        %v1956 = vunpack.c.0.s8 %v1955
        %v1957 = vlaneseq
        %v1958 = vshrl.u32 %v1957, 7
        %v1959 = vsub.s32 %v1956, %v1958
        %v1960 = vrot.slane %v1941, %v1959
        %v1961 = vcombine.low %v1952, %v1960
        %v1962 = vcombine.high %v1952, %v1960
        %v1964 = vunpack.c.l.s4 1934713408
        %v1965 = vunpack.c.0.s8 %v1964
        %v1966 = vlaneseq
        %v1967 = vshrl.u32 %v1966, 7
        %v1968 = vsub.s32 %v1965, %v1967
        %v1969 = vrot.slane %v1961, %v1968
        %v1971 = vunpack.c.l.s4 1934713408
        %v1972 = vunpack.c.0.s8 %v1971
        %v1973 = vlaneseq
        %v1974 = vshrl.u32 %v1973, 7
        %v1975 = vsub.s32 %v1972, %v1974
        %v1976 = vrot.slane %v1962, %v1975
        %v1977 = vcombine.high %v1969, 0
        %v1978 = vcombine.high %v1976, 0
        %v1981 = vunpack.c.l.s4 1983009808
        %v1982 = vunpack.c.0.s8 %v1981
        %v1983 = vlaneseq
        %v1984 = vshrl.u32 %v1983, 7
        %v1985 = vsub.s32 %v1982, %v1984
        %v1986 = vrot.slane %v1938, %v1985
        %v1989 = vunpack.c.l.s4 1983009808
        %v1990 = vunpack.c.0.s8 %v1989
        %v1991 = vlaneseq
        %v1992 = vshrl.u32 %v1991, 7
        %v1993 = vsub.s32 %v1990, %v1992
        %v1994 = vrot.slane %v1944, %v1993
        %v1995 = vcombine.low %v1986, %v1994
        %v1996 = vcombine.high %v1986, %v1994
        %v1998 = vunpack.c.l.s4 1934713408
        %v1999 = vunpack.c.0.s8 %v1998
        %v2000 = vlaneseq
        %v2001 = vshrl.u32 %v2000, 7
        %v2002 = vsub.s32 %v1999, %v2001
        %v2003 = vrot.slane %v1995, %v2002
        %v2005 = vunpack.c.l.s4 1934713408
        %v2006 = vunpack.c.0.s8 %v2005
        %v2007 = vlaneseq
        %v2008 = vshrl.u32 %v2007, 7
        %v2009 = vsub.s32 %v2006, %v2008
        %v2010 = vrot.slane %v1996, %v2009
        %v2011 = vcombine.high %v2003, 0
        %v2012 = vcombine.high %v2010, 0
        %v2014 = vunpack.c.l.b16 %v2003
        %v2015 = vpack.c.b16 %v2014, %v2014
        %2016 = vrot.lane.b32.xlu0 %v2015, 16
        %v2017 = vpop.permute.xlu0 %2016
        %v2019 = vunpack.c.l.b16 %v1977
        %v2020 = vpack.c.b16 %v2019, %v2019
        %2021 = vrot.lane.b32.xlu0 %v2020, 32
        %v2022 = vpop.permute.xlu0 %2021
        %v2024 = vunpack.c.l.b16 %v2011
        %v2025 = vpack.c.b16 %v2024, %v2024
        %2026 = vrot.lane.b32.xlu0 %v2025, 48
        %v2027 = vpop.permute.xlu0 %2026
        %v2029 = vunpack.c.l.b16 %v1976
        %v2030 = vpack.c.b16 %v2029, %v2029
        %2031 = vrot.lane.b32.xlu0 %v2030, 64
        %v2032 = vpop.permute.xlu0 %2031
        %v2034 = vunpack.c.l.b16 %v2010
        %v2035 = vpack.c.b16 %v2034, %v2034
        %2036 = vrot.lane.b32.xlu0 %v2035, 80
        %v2037 = vpop.permute.xlu0 %2036
        %v2039 = vunpack.c.l.b16 %v1978
        %v2040 = vpack.c.b16 %v2039, %v2039
        %2041 = vrot.lane.b32.xlu0 %v2040, 96
        %v2042 = vpop.permute.xlu0 %2041
        %v2044 = vunpack.c.l.b16 %v2012
        %v2045 = vpack.c.b16 %v2044, %v2044
        %2046 = vrot.lane.b32.xlu0 %v2045, 112
        %v2047 = vpop.permute.xlu0 %2046
        %v2050 = vsel %vm619, %v1969, %v2017
        %v2052 = vsel %vm623, %v2050, %v2022
        %v2054 = vsel %vm626, %v2052, %v2027
        %v2056 = vsel %vm629, %v2054, %v2032
        %v2058 = vsel %vm632, %v2056, %v2037
        %v2060 = vsel %vm635, %v2058, %v2042
        %v2062 = vsel %vm638, %v2060, %v2047
        %2064 = vst [vmem:[#allocation3 + $0x20] sm:$0x3] %v2062
        %2065 = vst [vmem:[#allocation3 + $0x20] sm:$0xc] 0
        %v2066 = vld [vmem:[%s1] sm:$0xf]
        %v2067 = vld [vmem:[#allocation3] sm:$0xf]
        %v2068 = vld [vmem:[#allocation3 + $0x4] sm:$0xf]
        %v2069 = vld [vmem:[#allocation3 + $0x8] sm:$0xf]
        %v2070 = vld [vmem:[#allocation3 + $0xc] sm:$0xf]
        %v2071 = vld [vmem:[#allocation3 + $0x10] sm:$0xf]
        %v2072 = vld [vmem:[#allocation3 + $0x14] sm:$0xf]
        %v2073 = vld [vmem:[#allocation3 + $0x18] sm:$0xf]
        %v2074 = vld [vmem:[#allocation3 + $0x1c] sm:$0xf]
        %v2075 = vld [vmem:[#allocation3 + $0x20] sm:$0xf]
        %v2076 = vld [vmem:[%s2] sm:$0xff]
        %2078 = vset.pattern.permute.xlu0 0
        %2079 = vperm.xlu0 %2078, %v2076
        %v2080 = vpop.permute.xlu0 %2079
        %v2091 = vunpack.c.l.b16 %v2067
        %v2092 = vunpack.c.l.b16 %v2068
        %v2093 = vunpack.c.l.b16 %v2069
        %v2094 = vunpack.c.l.b16 %v2070
        %v2095 = vunpack.c.l.b16 %v2071
        %v2096 = vunpack.c.l.b16 %v2072
        %v2097 = vunpack.c.l.b16 %v2073
        %v2098 = vunpack.c.l.b16 %v2074
        %v2099 = vunpack.c.l.b16 %v2075
        %v2100 = vpack.c.b16 %v2092, %v2091
        %v2101 = vpack.c.b16 %v2094, %v2093
        %v2102 = vpack.c.b16 %v2096, %v2095
        %v2103 = vpack.c.b16 %v2098, %v2097
        %v2104 = vpack.c.b16 %v2099, %v2099
        %vm2109 = vcmask 588800
        %v2111 = vsel %vm2109, %v2066, 0
        %vm2113 = vcmask 1043456
        %v2115 = vsel %vm2113, %v2104, 0
        %2117 = vmatprep.subr.bf16.mxu0 0
        %2118 = vmatpush1.bf16.msra.mxu0 %v2100
        %2119 = vmatprep.subr.bf16.mxu0 0
        %2120 = vmatpush1.bf16.msra.mxu0 %v2101
        %2121 = vmatprep.subr.bf16.mxu0 0
        %2122 = vmatpush1.bf16.msra.mxu0 %v2102
        %2123 = vmatprep.subr.bf16.mxu0 0
        %2124 = vmatpush1.bf16.msra.mxu0 %v2103
        %2125 = vmatprep.subr.bf16.mxu0 0
        %2126 = vmatpush1.bf16.msra.mxu0 %v2115
        %2127 = vmatprep.subr.bf16.mxu0 0
        %2128 = vmatpush1.bf16.msra.mxu0 0
        %2129 = vmatprep.subr.bf16.mxu0 0
        %2130 = vmatpush1.bf16.msra.mxu0 0
        %2131 = vmatprep.subr.bf16.mxu0 0
        %2132 = vmatpush1.bf16.msra.mxu0 0
        %2133 = vmatprep.subr.bf16.mxu0 0
        %2134 = vmatpush1.bf16.msra.mxu0 0
        %2135 = vmatprep.subr.bf16.mxu0 0
        %2136 = vmatpush1.bf16.msra.mxu0 0
        %2137 = vmatprep.subr.bf16.mxu0 0
        %2138 = vmatpush1.bf16.msra.mxu0 0
        %2139 = vmatprep.subr.bf16.mxu0 0
        %2140 = vmatpush1.bf16.msra.mxu0 0
        %2141 = vmatprep.subr.bf16.mxu0 0
        %2142 = vmatpush1.bf16.msra.mxu0 0
        %2143 = vmatprep.subr.bf16.mxu0 0
        %2144 = vmatpush1.bf16.msra.mxu0 0
        %2145 = vmatprep.subr.bf16.mxu0 0
        %2146 = vmatpush1.bf16.msra.mxu0 0
        %2147 = vmatprep.subr.bf16.mxu0 0
        %2148 = vmatpush1.bf16.msra.mxu0 0
        %2149 = vmatprep.mubr.bf16.mxu0 0
        %2150 = vmatmul.mubr.bf16.gmra.mrb[0].mxu0 %v2111
        %v2151 = vpop.f32.mrb[0].mxu0
        %v2152 = vadd.f32 %v2080, %v2151
        %v2153 = vpop.f32.mrb[0].mxu0
        %v2154 = vpop.f32.mrb[0].mxu0
        %v2155 = vpop.f32.mrb[0].mxu0
        %2156 = vdwg.mxu0
        %v2157 = vadd.f32 %v2152, 3.0
        %v2158 = vmax.f32 %v2157, 0.0
        %v2159 = vmin.f32 %v2158, 6.0
        %v2160 = vmul.f32 %v2152, %v2159
        %v2161 = vmul.f32 %v2160, 0.16666667
        %2162 = vst [vmem:[%s202] sm:$0xff] %v2161
        %s2163 = sand.u32 %s110, 1
        %s2164 = scalar_lea.sflag [#allocation6], %s2163
        %s2165 = sand.u32 %s110, 1
        %s2166 = smul.addr %s2165, 8
        %s2167 = scalar_lea.vmem [#allocation7], %s2166
        // Predicated region
        $region49: #{tpu_custom_call.1} parent=31 // pred_check
          %p2168 = pneg %p120
        $region50: #{tpu_custom_call.1} parent=31 // pred_check_branch
          %2170 = sbr.rel (%p2168) target = $region52
        $region51: #{tpu_custom_call.1} parent=31 // pred_region
          %s2172 = ssub.s32 128, 128
          %2173 = vsyncadd %s2164, %s2172
          %s2174 = smul.addr %s24, 2
          %s2175 = sadd.s32 %s25, %s2174
          %s2176 = smul.addr %s2175, 128
          %s2177 = scalar_lea.hbm %s3, %s2176
          %s2179 = sshll.u32 %s2167, 4
          %s2180 = int_to_ptr.vmem [resolvable:$true] %s2179
          %2182 = dma.vmem_to_hbm [thread:$0]  %s2180, 128, %s2177, %s2164
        $region52: #{tpu_custom_call.1} parent=31 // pred_fallthru
          _
      $region32: #{tpu_custom_call.1} parent=5 // pred_fallthru
        _
      %p2183 = scmp.le.s32.totalorder 2, %s15
      // Predicated region
      $region53: #{tpu_custom_call.1} parent=5 // pred_check
        %p2184 = pneg %p2183
      $region54: #{tpu_custom_call.1} parent=5 // pred_check_branch
        %2186 = sbr.rel (%p2184) target = $region56
      $region55: #{tpu_custom_call.1} parent=5 // pred_region
        %s2187 = ssub.s32 %s15, 2
        // Predicated region
        $region57: #{tpu_custom_call.1} parent=55 // pred_check
          %p2188 = pneg %p126
        $region58: #{tpu_custom_call.1} parent=55 // pred_check_branch
          %2190 = sbr.rel (%p2188) target = $region60
        $region59: #{tpu_custom_call.1} parent=55 // pred_region
          %s2191 = sand.u32 %s111, 1
          %s2192 = scalar_lea.sflag [#allocation6], %s2191
          %s2193 = sand.u32 %s111, 1
          %s2194 = smul.addr %s2193, 8
          %s2195 = scalar_lea.vmem [#allocation7], %s2194
          %2196 = dma.done %s2192, 128
        $region60: #{tpu_custom_call.1} parent=55 // pred_fallthru
          _
      $region56: #{tpu_custom_call.1} parent=5 // pred_fallthru
        _
    $region6: #{tpu_custom_call.1} parent=1 // loop_footer
      %s19 = sadd.s32 1, %s15
    $region7: #{tpu_custom_call.1} parent=1 // loop_footer_branch
      %14 = sbr.rel target = $region3
    $region8: #{tpu_custom_call.1} parent=1 // loop_exit
      _
    %2197 = vsyncpa [#allocation5], 1
    %s2198 = scalar_lea.sflag [#allocation5], 1
    %2199 = vsyncpa %s2198, 1
    %2200 = vsyncpa [#allocation6], 1
    %s2201 = scalar_lea.sflag [#allocation6], 1
    %2202 = vsyncpa %s2201, 1

</llo_original>
